<compile_context>
chip_gen: v6e
topology: v6e:2x2x1
jax: 0.10.0
libtpu: 0.0.40
codegen_flags: <defaults>
</compile_context>

<pallas_src>
import functools

import jax
import jax.numpy as jnp
from jax.experimental import pallas as pl
from jax.experimental.pallas import tpu as pltpu


def _round_up(x, m):
    return (x + m - 1) // m * m


# ----------------------------------------------------------------------------
# Pallas kernel: one (batch element, residual block) per grid step.
# ----------------------------------------------------------------------------
def backbone_kernel(fproj_ref, kf_ref, kbr_ref, Ws4_ref, Wo12_ref,
                    inp_ref, Win_ref, bin_ref,
                    lng_ref, lnb_ref, Dp_ref, bs4_ref, bo12_ref,
                    Wh1_ref, bh1_ref, Wh2_ref, bh2_ref,
                    out_ref,
                    x_sc, skip_sc, kf_sc, kb_sc,
                    *, seq_len, hidden):
    L, H = seq_len, hidden
    f32, bf16 = jnp.float32, jnp.bfloat16
    i = pl.program_id(1)                     # residual-block index (inner, 'arbitrary')

    # ---- first block of this batch element: input_init (Linear + ReLU) -----
    @pl.when(i == 0)
    def _():
        x0 = (jnp.dot(inp_ref[...].astype(bf16), Win_ref[...],
                      preferred_element_type=f32) + bin_ref[...])
        x_sc[...] = jnp.maximum(x0, 0.0)
        skip_sc[...] = jnp.zeros_like(skip_sc)

    x = x_sc[...]                                            # (L, H) residual stream

    # --------------------- S4Layer: LayerNorm over channels -----------------
    mu = jnp.mean(x, axis=-1, keepdims=True)
    var = jnp.mean((x - mu) ** 2, axis=-1, keepdims=True)
    z = (x - mu) * jax.lax.rsqrt(var + 1e-5)
    z = z * lng_ref[pl.ds(i, 1), :] + lnb_ref[pl.ds(i, 1), :]

    # -- S4 inner: bidirectional depthwise long conv + per-channel D skip ----
    # Stage the bf16 streamed taps into f32 scratch once per block (halves
    # their HBM traffic; keeps dynamic per-shift row loads on an f32 ref).
    kf_sc[...] = kf_ref[...].astype(f32)
    kb_sc[...] = kbr_ref[...].astype(f32)      # kb arrives pre-reversed along L

    # One pltpu.roll per shift serves BOTH directions:
    #   rolled[l] = z[(l - tau) mod L]
    #   l >= tau -> causal tap kf[tau];  l < tau -> anticausal tap kb[L-1-tau]
    #   (row tau of the reversed kb), so both taps share index tau.
    rows = jax.lax.broadcasted_iota(jnp.int32, (L, H), 0)    # hoisted out of loop
    y0 = z * (Dp_ref[pl.ds(i, 1), :] + kf_sc[0:1, :])        # tau = 0 term + D skip

    def conv_body(tau, carry):
        y, zc = carry
        zc = pltpu.roll(zc, 1, 0)                            # static shift-by-1 (XLU)
        coeff = jnp.where(rows >= tau,
                          kf_sc[pl.ds(tau, 1), :],
                          kb_sc[pl.ds(tau, 1), :])
        return y + coeff * zc, zc

    y, _ = jax.lax.fori_loop(1, L, conv_body, (y0, z))

    # TODO(synk): tanh-approx GELU; PyTorch nn.GELU default is the exact erf form.
    y = jax.nn.gelu(y, approximate=True)
    z = (jnp.dot(y.astype(bf16), Ws4_ref[...], preferred_element_type=f32)
         + bs4_ref[pl.ds(i, 1), :])
    x = z + x                                                # S4Layer residual

    # ------ S4Block: feature encoder (hoisted), gating, fused 1x1 convs -----
    out = x + fproj_ref[...]                                 # precomputed feats @ Wf + bf
    gate = jnp.tanh(out) * jax.nn.sigmoid(out)
    o12 = (jnp.dot(gate.astype(bf16), Wo12_ref[...], preferred_element_type=f32)
           + bo12_ref[pl.ds(i, 1), :])                       # fused out_linear1|2
    x_new = o12[:, :H] + x
    skip_new = skip_sc[...] + o12[:, H:]
    x_sc[...] = x_new
    skip_sc[...] = skip_new

    # ------------------ output head after the last residual block -----------
    @pl.when(i == pl.num_programs(1) - 1)
    def _():
        h = jnp.maximum(
            jnp.dot(skip_new.astype(bf16), Wh1_ref[...],
                    preferred_element_type=f32) + bh1_ref[...], 0.0)
        o = (jnp.dot(h.astype(bf16), Wh2_ref[...], preferred_element_type=f32)
             + bh2_ref[...])
        out_ref[...] = o + inp_ref[...]                      # init_skip (pad lanes = 0)


# ----------------------------------------------------------------------------
# Wrapper
# ----------------------------------------------------------------------------
def backbone_forward(inp, feats, params, *, num_blocks):
    f32, bf16 = jnp.float32, jnp.bfloat16
    B, L, Din = inp.shape
    H = params['Win'].shape[1]
    Dout = params['Wh2'].shape[1]
    NB = num_blocks
    assert Din == Dout, "init_skip requires input_dim == output_dim"

    P = _round_up(max(Din, Dout), 128)        # lane-dense io channel padding

    # --------------- wrapper-side layout plumbing & weight fusion -----------
    inp_pad = jnp.pad(inp.astype(f32), ((0, 0), (0, 0), (0, P - Din)))
    Win_b = jnp.pad(params['Win'], ((0, P - Din), (0, 0))).astype(bf16)
    Wh1_b = params['Wh1'].astype(bf16)
    Wh2_b = jnp.pad(params['Wh2'], ((0, 0), (0, P - Dout))).astype(bf16)
    bh2_p = jnp.pad(params['bh2'], ((0, 0), (0, P - Dout)))
    # feature encoder hoisted out of the block loop: one wide matmul, all blocks
    fproj = (jnp.einsum('blf,nfh->bnlh', feats.astype(f32), params['Wf'])
             + params['bf'][None, :, None, :])                       # (B, NB, L, H)
    # fuse the two 1x1 output convs (they share the same LHS `gate`)
    Wo12 = jnp.concatenate([params['Wo1'], params['Wo2']], axis=-1).astype(bf16)
    bo12 = jnp.concatenate([params['bo1'], params['bo2']], axis=-1)
    Ws4_b = params['Ws4'].astype(bf16)
    kf_b = params['kf'].astype(bf16)
    kbr_b = params['kb'][:, ::-1, :].astype(bf16)   # reversed along L (see kernel)

    kern = functools.partial(backbone_kernel, seq_len=L, hidden=H)

    per_blk = lambda shape: pl.BlockSpec(shape, lambda b, i: (i, 0, 0))
    const2 = lambda shape: pl.BlockSpec(shape, lambda b, i: (0, 0))

    in_specs = [
        pl.BlockSpec((None, None, L, H), lambda b, i: (b, i, 0, 0)),   # fproj
        per_blk((None, L, H)),                                         # kf
        per_blk((None, L, H)),                                         # kb (reversed)
        per_blk((None, H, H)),                                         # Ws4
        per_blk((None, H, 2 * H)),                                     # Wo1|Wo2 fused
        pl.BlockSpec((None, L, P), lambda b, i: (b, 0, 0)),            # padded input
        const2((P, H)), const2((1, H)),                                # Win, bin
        const2((NB, H)), const2((NB, H)),                              # lng, lnb
        const2((NB, H)), const2((NB, H)), const2((NB, 2 * H)),         # Dp, bs4, bo12
        const2((H, H)), const2((1, H)),                                # Wh1, bh1
        const2((H, P)), const2((1, P)),                                # Wh2, bh2
    ]
    out_specs = pl.BlockSpec((None, L, P), lambda b, i: (b, 0, 0))

    args = (fproj, kf_b, kbr_b, Ws4_b, Wo12, inp_pad,
            Win_b, params['bin'], params['lng'], params['lnb'],
            params['Dp'], params['bs4'], bo12, Wh1_b, params['bh1'],
            Wh2_b, bh2_p)

    # Advisory cost estimate so XLA schedules around the long-running call.
    bytes_accessed = sum(int(a.size) * a.dtype.itemsize for a in args) + B * L * P * 4
    mm_flops = 2 * B * (L * P * H + NB * (3 * L * H * H) + L * H * H + L * H * P)
    conv_flops = 3 * B * NB * L * L * H
    cost = pl.CostEstimate(flops=int(mm_flops + conv_flops),
                           transcendentals=int(4 * B * NB * L * H),
                           bytes_accessed=int(bytes_accessed))

    out = pl.pallas_call(
        kern,
        grid=(B, NB),
        in_specs=in_specs,
        out_specs=out_specs,
        out_shape=jax.ShapeDtypeStruct((B, L, P), f32),
        scratch_shapes=[pltpu.VMEM((L, H), f32)] * 4,   # x, skip, kf stage, kb stage
        compiler_params=pltpu.CompilerParams(
            dimension_semantics=("parallel", "arbitrary")),
        cost_estimate=cost,
    )(*args)
    return out[..., :Dout]


# ----------------------------------------------------------------------------
# Deterministic parameter init (shapes follow the PyTorch __init__)
# ----------------------------------------------------------------------------
def init_params(key, Din, H, Dout, F, L, NB):
    ks = jax.random.split(key, 20)
    n = lambda k, shape, s=0.05: jax.random.normal(k, shape, jnp.float32) * s
    return dict(
        Win=n(ks[0], (Din, H)),  bin=n(ks[1], (1, H)),
        lng=jnp.ones((NB, H), jnp.float32), lnb=jnp.zeros((NB, H), jnp.float32),
        kf=n(ks[2], (NB, L, H)), kb=n(ks[3], (NB, L, H)),
        Dp=n(ks[4], (NB, H), 1.0),
        Ws4=n(ks[5], (NB, H, H)), bs4=n(ks[6], (NB, H)),
        Wf=n(ks[7], (NB, F, H)), bf=n(ks[8], (NB, H)),
        Wo1=n(ks[9], (NB, H, H)), bo1=n(ks[10], (NB, H)),
        Wo2=n(ks[11], (NB, H, H)), bo2=n(ks[12], (NB, H)),
        Wh1=n(ks[13], (H, H)), bh1=n(ks[14], (1, H)),
        Wh2=n(ks[15], (H, Dout)), bh2=n(ks[16], (1, Dout)),
    )


# ----------------------------------------------------------------------------
# Pure-JAX f32 reference (same math, independent formulation of the long conv)
# ----------------------------------------------------------------------------
def reference_forward(inp, feats, p, num_blocks):
    B, L, _ = inp.shape
    H = p['Win'].shape[1]
    x = jax.nn.relu(inp @ p['Win'] + p['bin'])
    skip_sum = jnp.zeros_like(x)
    for i in range(num_blocks):
        mu = x.mean(-1, keepdims=True)
        var = ((x - mu) ** 2).mean(-1, keepdims=True)
        z = (x - mu) * jax.lax.rsqrt(var + 1e-5) * p['lng'][i] + p['lnb'][i]
        y = z * p['Dp'][i]
        for tau in range(L):
            shifted = jnp.concatenate(
                [jnp.zeros((B, tau, H)), z[:, :L - tau, :]], axis=1)
            y = y + p['kf'][i, tau] * shifted
        for s in range(1, L):
            shifted = jnp.concatenate(
                [z[:, s:, :], jnp.zeros((B, s, H))], axis=1)
            y = y + p['kb'][i, s - 1] * shifted
        y = jax.nn.gelu(y, approximate=True)
        x = (y @ p['Ws4'][i] + p['bs4'][i]) + x
        out = x + feats @ p['Wf'][i] + p['bf'][i]
        gate = jnp.tanh(out) * jax.nn.sigmoid(out)
        out1 = gate @ p['Wo1'][i] + p['bo1'][i]
        out2 = gate @ p['Wo2'][i] + p['bo2'][i]
        x = out1 + x
        skip_sum = skip_sum + out2
    h = jax.nn.relu(skip_sum @ p['Wh1'] + p['bh1'])
    return h @ p['Wh2'] + p['bh2'] + inp


# ----------------------------------------------------------------------------
if __name__ == "__main__":
    B, L = 2, 8
    input_dim, hidden_dim, output_dim = 4, 32, 4
    num_features, num_blocks = 3, 2

    key = jax.random.PRNGKey(0)
    k_in, k_feat, k_par = jax.random.split(key, 3)
    inp = jax.random.normal(k_in, (B, L, input_dim), jnp.float32)
    feats = jax.random.normal(k_feat, (B, L, num_features), jnp.float32)
    params = init_params(k_par, input_dim, hidden_dim, output_dim,
                         num_features, L, num_blocks)

    out = backbone_forward(inp, feats, params, num_blocks=num_blocks)
    out = jax.block_until_ready(out)

    ref = jax.block_until_ready(reference_forward(inp, feats, params, num_blocks))
    max_err = float(jnp.max(jnp.abs(out - ref)))
    assert out.shape == (B, L, output_dim)
    # bf16 weights / bf16 MXU operands with f32 accumulation vs the pure-f32
    # reference: observed error is ~1e-3 at these scales.
    assert max_err < 2e-2, f"mismatch vs reference: {max_err}"

    print("KERNEL_OK")
</pallas_src>

<mosaic_0001>
module attributes {stable_mosaic.version = 11 : i64} {
  func.func @backbone_kernel(%arg0: i32, %arg1: i32, %arg2: memref<1x1x8x32xf32, #tpu.memory_space<vmem>>, %arg3: memref<1x8x32xbf16, #tpu.memory_space<vmem>>, %arg4: memref<1x8x32xbf16, #tpu.memory_space<vmem>>, %arg5: memref<1x32x32xbf16, #tpu.memory_space<vmem>>, %arg6: memref<1x32x64xbf16, #tpu.memory_space<vmem>>, %arg7: memref<1x8x128xf32, #tpu.memory_space<vmem>>, %arg8: memref<128x32xbf16, #tpu.memory_space<vmem>>, %arg9: memref<1x32xf32, #tpu.memory_space<vmem>>, %arg10: memref<2x32xf32, #tpu.memory_space<vmem>>, %arg11: memref<2x32xf32, #tpu.memory_space<vmem>>, %arg12: memref<2x32xf32, #tpu.memory_space<vmem>>, %arg13: memref<2x32xf32, #tpu.memory_space<vmem>>, %arg14: memref<2x64xf32, #tpu.memory_space<vmem>>, %arg15: memref<32x32xbf16, #tpu.memory_space<vmem>>, %arg16: memref<1x32xf32, #tpu.memory_space<vmem>>, %arg17: memref<32x128xbf16, #tpu.memory_space<vmem>>, %arg18: memref<1x128xf32, #tpu.memory_space<vmem>>, %arg19: memref<1x8x128xf32, #tpu.memory_space<vmem>>, %arg20: memref<8x32xf32, #tpu.memory_space<vmem>>, %arg21: memref<8x32xf32, #tpu.memory_space<vmem>>, %arg22: memref<8x32xf32, #tpu.memory_space<vmem>>, %arg23: memref<8x32xf32, #tpu.memory_space<vmem>>) attributes {dimension_semantics = [#tpu.dimension_semantics<parallel>, #tpu.dimension_semantics<arbitrary>], iteration_bounds = array<i64: 2, 2>, scalar_prefetch = 0 : i64, scratch_operands = 4 : i64, tpu.core_type = #tpu.core_type<tc>, window_params = [{transform_indices = @transform_0, window_bounds = array<i64: 1, 1, 8, 32>}, {transform_indices = @transform_1, window_bounds = array<i64: 1, 8, 32>}, {transform_indices = @transform_2, window_bounds = array<i64: 1, 8, 32>}, {transform_indices = @transform_3, window_bounds = array<i64: 1, 32, 32>}, {transform_indices = @transform_4, window_bounds = array<i64: 1, 32, 64>}, {transform_indices = @transform_5, window_bounds = array<i64: 1, 8, 128>}, {pipeline_mode = #tpu.pipeline_mode<synchronous>, transform_indices = @transform_6, window_bounds = array<i64: 128, 32>}, {pipeline_mode = #tpu.pipeline_mode<synchronous>, transform_indices = @transform_7, window_bounds = array<i64: 1, 32>}, {pipeline_mode = #tpu.pipeline_mode<synchronous>, transform_indices = @transform_8, window_bounds = array<i64: 2, 32>}, {pipeline_mode = #tpu.pipeline_mode<synchronous>, transform_indices = @transform_9, window_bounds = array<i64: 2, 32>}, {pipeline_mode = #tpu.pipeline_mode<synchronous>, transform_indices = @transform_10, window_bounds = array<i64: 2, 32>}, {pipeline_mode = #tpu.pipeline_mode<synchronous>, transform_indices = @transform_11, window_bounds = array<i64: 2, 32>}, {pipeline_mode = #tpu.pipeline_mode<synchronous>, transform_indices = @transform_12, window_bounds = array<i64: 2, 64>}, {pipeline_mode = #tpu.pipeline_mode<synchronous>, transform_indices = @transform_13, window_bounds = array<i64: 32, 32>}, {pipeline_mode = #tpu.pipeline_mode<synchronous>, transform_indices = @transform_14, window_bounds = array<i64: 1, 32>}, {pipeline_mode = #tpu.pipeline_mode<synchronous>, transform_indices = @transform_15, window_bounds = array<i64: 32, 128>}, {pipeline_mode = #tpu.pipeline_mode<synchronous>, transform_indices = @transform_16, window_bounds = array<i64: 1, 128>}, {transform_indices = @transform_17, window_bounds = array<i64: 1, 8, 128>}]} {
    %c0_i32 = arith.constant 0 : i32
    %0 = arith.cmpi eq, %arg1, %c0_i32 : i32
    %1 = arith.extui %0 : i1 to i32
    %c0_i32_0 = arith.constant 0 : i32
    %2 = arith.cmpi ne, %1, %c0_i32_0 : i32
    scf.if %2 {
      %c0_50 = arith.constant 0 : index
      %c0_51 = arith.constant 0 : index
      %c0_52 = arith.constant 0 : index
      %97 = vector.load %arg7[%c0_50, %c0_51, %c0_52] : memref<1x8x128xf32, #tpu.memory_space<vmem>>, vector<1x8x128xf32>
      %98 = vector.shape_cast %97 : vector<1x8x128xf32> to vector<8x128xf32>
      %99 = arith.truncf %98 : vector<8x128xf32> to vector<8x128xbf16>
      %c0_53 = arith.constant 0 : index
      %c0_54 = arith.constant 0 : index
      %100 = vector.load %arg8[%c0_53, %c0_54] : memref<128x32xbf16, #tpu.memory_space<vmem>>, vector<128x32xbf16>
      %cst_55 = arith.constant dense<0.000000e+00> : vector<8x32xf32>
      %101 = tpu.matmul %99, %100, %cst_55 {dimension_numbers = #tpu.dot_dimension_numbers<[1], [0], [0], [1], [0, 0, 1, 1], [], []>} : vector<8x128xbf16>, vector<128x32xbf16>, vector<8x32xf32> -> vector<8x32xf32>
      %c0_56 = arith.constant 0 : index
      %c0_57 = arith.constant 0 : index
      %102 = vector.load %arg9[%c0_56, %c0_57] : memref<1x32xf32, #tpu.memory_space<vmem>>, vector<1x32xf32>
      %103 = vector.broadcast %102 : vector<1x32xf32> to vector<8x32xf32>
      %104 = arith.addf %101, %103 : vector<8x32xf32>
      %cst_58 = arith.constant 0.000000e+00 : f32
      %105 = vector.broadcast %cst_58 : f32 to vector<8x32xf32>
      %106 = arith.maximumf %104, %105 : vector<8x32xf32>
      %c0_59 = arith.constant 0 : index
      %c0_60 = arith.constant 0 : index
      %107 = vector.load %arg20[%c0_59, %c0_60] : memref<8x32xf32, #tpu.memory_space<vmem>>, vector<8x32xf32>
      tpu.vector_store %arg20[%c0_59, %c0_60], %106 {strides = array<i32>} : memref<8x32xf32, #tpu.memory_space<vmem>>, vector<8x32xf32>,
      %cst_61 = arith.constant 0.000000e+00 : f32
      %108 = vector.broadcast %cst_61 : f32 to vector<8x32xf32>
      %c0_62 = arith.constant 0 : index
      %c0_63 = arith.constant 0 : index
      %109 = vector.load %arg21[%c0_62, %c0_63] : memref<8x32xf32, #tpu.memory_space<vmem>>, vector<8x32xf32>
      tpu.vector_store %arg21[%c0_62, %c0_63], %108 {strides = array<i32>} : memref<8x32xf32, #tpu.memory_space<vmem>>, vector<8x32xf32>,
    } else {
    }
    %c0 = arith.constant 0 : index
    %c0_1 = arith.constant 0 : index
    %3 = vector.load %arg20[%c0, %c0_1] : memref<8x32xf32, #tpu.memory_space<vmem>>, vector<8x32xf32>
    %cst = arith.constant dense<0.000000e+00> : vector<8xf32>
    %4 = vector.multi_reduction <add>, %3, %cst [1] : vector<8x32xf32> to vector<8xf32>
    %5 = vector.shape_cast %4 : vector<8xf32> to vector<8x1xf32>
    %cst_2 = arith.constant 3.200000e+01 : f32
    %6 = vector.broadcast %cst_2 : f32 to vector<8x1xf32>
    %7 = arith.divf %5, %6 : vector<8x1xf32>
    %8 = vector.broadcast %7 : vector<8x1xf32> to vector<8x32xf32>
    %9 = arith.subf %3, %8 : vector<8x32xf32>
    %10 = arith.mulf %9, %9 : vector<8x32xf32>
    %cst_3 = arith.constant dense<0.000000e+00> : vector<8xf32>
    %11 = vector.multi_reduction <add>, %10, %cst_3 [1] : vector<8x32xf32> to vector<8xf32>
    %12 = vector.shape_cast %11 : vector<8xf32> to vector<8x1xf32>
    %cst_4 = arith.constant 3.200000e+01 : f32
    %13 = vector.broadcast %cst_4 : f32 to vector<8x1xf32>
    %14 = arith.divf %12, %13 : vector<8x1xf32>
    %15 = vector.broadcast %7 : vector<8x1xf32> to vector<8x32xf32>
    %16 = arith.subf %3, %15 : vector<8x32xf32>
    %cst_5 = arith.constant 9.99999974E-6 : f32
    %17 = vector.broadcast %cst_5 : f32 to vector<8x1xf32>
    %18 = arith.addf %14, %17 : vector<8x1xf32>
    %19 = math.rsqrt %18 : vector<8x1xf32>
    %20 = vector.broadcast %19 : vector<8x1xf32> to vector<8x32xf32>
    %21 = arith.mulf %16, %20 : vector<8x32xf32>
    %22 = arith.index_cast %arg1 : i32 to index
    %c0_6 = arith.constant 0 : index
    %23 = vector.load %arg10[%22, %c0_6] : memref<2x32xf32, #tpu.memory_space<vmem>>, vector<1x32xf32>
    %24 = vector.broadcast %23 : vector<1x32xf32> to vector<8x32xf32>
    %25 = arith.mulf %21, %24 : vector<8x32xf32>
    %26 = arith.index_cast %arg1 : i32 to index
    %c0_7 = arith.constant 0 : index
    %27 = vector.load %arg11[%26, %c0_7] : memref<2x32xf32, #tpu.memory_space<vmem>>, vector<1x32xf32>
    %28 = vector.broadcast %27 : vector<1x32xf32> to vector<8x32xf32>
    %29 = arith.addf %25, %28 : vector<8x32xf32>
    %c0_8 = arith.constant 0 : index
    %c0_9 = arith.constant 0 : index
    %c0_10 = arith.constant 0 : index
    %30 = vector.load %arg3[%c0_8, %c0_9, %c0_10] : memref<1x8x32xbf16, #tpu.memory_space<vmem>>, vector<1x8x32xbf16>
    %31 = vector.shape_cast %30 : vector<1x8x32xbf16> to vector<8x32xbf16>
    %32 = arith.extf %31 : vector<8x32xbf16> to vector<8x32xf32>
    %c0_11 = arith.constant 0 : index
    %c0_12 = arith.constant 0 : index
    %33 = vector.load %arg22[%c0_11, %c0_12] : memref<8x32xf32, #tpu.memory_space<vmem>>, vector<8x32xf32>
    tpu.vector_store %arg22[%c0_11, %c0_12], %32 {strides = array<i32>} : memref<8x32xf32, #tpu.memory_space<vmem>>, vector<8x32xf32>,
    %c0_13 = arith.constant 0 : index
    %c0_14 = arith.constant 0 : index
    %c0_15 = arith.constant 0 : index
    %34 = vector.load %arg4[%c0_13, %c0_14, %c0_15] : memref<1x8x32xbf16, #tpu.memory_space<vmem>>, vector<1x8x32xbf16>
    %35 = vector.shape_cast %34 : vector<1x8x32xbf16> to vector<8x32xbf16>
    %36 = arith.extf %35 : vector<8x32xbf16> to vector<8x32xf32>
    %c0_16 = arith.constant 0 : index
    %c0_17 = arith.constant 0 : index
    %37 = vector.load %arg23[%c0_16, %c0_17] : memref<8x32xf32, #tpu.memory_space<vmem>>, vector<8x32xf32>
    tpu.vector_store %arg23[%c0_16, %c0_17], %36 {strides = array<i32>} : memref<8x32xf32, #tpu.memory_space<vmem>>, vector<8x32xf32>,
    %38 = tpu.iota {dimensions = array<i32: 0>} : vector<8x32xi32>
    %39 = arith.index_cast %arg1 : i32 to index
    %c0_18 = arith.constant 0 : index
    %40 = vector.load %arg12[%39, %c0_18] : memref<2x32xf32, #tpu.memory_space<vmem>>, vector<1x32xf32>
    %c0_19 = arith.constant 0 : index
    %c0_20 = arith.constant 0 : index
    %41 = vector.load %arg22[%c0_19, %c0_20] : memref<8x32xf32, #tpu.memory_space<vmem>>, vector<1x32xf32>
    %42 = arith.addf %40, %41 : vector<1x32xf32>
    %43 = vector.broadcast %42 : vector<1x32xf32> to vector<8x32xf32>
    %44 = arith.mulf %29, %43 : vector<8x32xf32>
    %c1_i32 = arith.constant 1 : i32
    %c7_i32 = arith.constant 7 : i32
    %45 = arith.addi %c1_i32, %c7_i32 : i32
    %c1_i32_21 = arith.constant 1 : i32
    %46:2 = scf.for %arg24 = %c1_i32 to %45 step %c1_i32_21 iter_args(%arg25 = %44, %arg26 = %29) -> (vector<8x32xf32>, vector<8x32xf32>)  : i32 {
      %c1_i32_50 = arith.constant 1 : i32
      %97 = tpu.dynamic_rotate %arg26 by %c1_i32_50 dim 0 : vector<8x32xf32>, i32 -> vector<8x32xf32>
      %98 = vector.broadcast %arg24 : i32 to vector<8x32xi32>
      %99 = arith.cmpi sge, %38, %98 : vector<8x32xi32>
      %100 = arith.index_cast %arg24 : i32 to index
      %c0_51 = arith.constant 0 : index
      %101 = vector.load %arg22[%100, %c0_51] : memref<8x32xf32, #tpu.memory_space<vmem>>, vector<1x32xf32>
      %102 = arith.index_cast %arg24 : i32 to index
      %c0_52 = arith.constant 0 : index
      %103 = vector.load %arg23[%102, %c0_52] : memref<8x32xf32, #tpu.memory_space<vmem>>, vector<1x32xf32>
      %104 = vector.shape_cast %101 : vector<1x32xf32> to vector<1x32xf32>
      %105 = vector.broadcast %104 : vector<1x32xf32> to vector<8x32xf32>
      %106 = vector.shape_cast %103 : vector<1x32xf32> to vector<1x32xf32>
      %107 = vector.broadcast %106 : vector<1x32xf32> to vector<8x32xf32>
      %108 = arith.select %99, %105, %107 : vector<8x32xi1>, vector<8x32xf32>
      %109 = arith.mulf %108, %97 : vector<8x32xf32>
      %110 = arith.addf %arg25, %109 : vector<8x32xf32>
      scf.yield %110, %97 : vector<8x32xf32>, vector<8x32xf32>
    }
    %c7_i32_22 = arith.constant 7 : i32
    %47 = arith.mulf %46#0, %46#0 : vector<8x32xf32>
    %48 = arith.mulf %46#0, %47 : vector<8x32xf32>
    %cst_23 = arith.constant 4.471500e-02 : f32
    %49 = vector.broadcast %cst_23 : f32 to vector<8x32xf32>
    %50 = arith.mulf %49, %48 : vector<8x32xf32>
    %51 = arith.addf %46#0, %50 : vector<8x32xf32>
    %cst_24 = arith.constant 0.797884583 : f32
    %52 = vector.broadcast %cst_24 : f32 to vector<8x32xf32>
    %53 = arith.mulf %52, %51 : vector<8x32xf32>
    %54 = math.tanh %53 : vector<8x32xf32>
    %cst_25 = arith.constant 1.000000e+00 : f32
    %55 = vector.broadcast %cst_25 : f32 to vector<8x32xf32>
    %56 = arith.addf %55, %54 : vector<8x32xf32>
    %cst_26 = arith.constant 5.000000e-01 : f32
    %57 = vector.broadcast %cst_26 : f32 to vector<8x32xf32>
    %58 = arith.mulf %57, %56 : vector<8x32xf32>
    %59 = arith.mulf %46#0, %58 : vector<8x32xf32>
    %60 = arith.truncf %59 : vector<8x32xf32> to vector<8x32xbf16>
    %c0_27 = arith.constant 0 : index
    %c0_28 = arith.constant 0 : index
    %c0_29 = arith.constant 0 : index
    %61 = vector.load %arg5[%c0_27, %c0_28, %c0_29] : memref<1x32x32xbf16, #tpu.memory_space<vmem>>, vector<1x32x32xbf16>
    %62 = vector.shape_cast %61 : vector<1x32x32xbf16> to vector<32x32xbf16>
    %cst_30 = arith.constant dense<0.000000e+00> : vector<8x32xf32>
    %63 = tpu.matmul %60, %62, %cst_30 {dimension_numbers = #tpu.dot_dimension_numbers<[1], [0], [0], [1], [0, 0, 1, 1], [], []>} : vector<8x32xbf16>, vector<32x32xbf16>, vector<8x32xf32> -> vector<8x32xf32>
    %64 = arith.index_cast %arg1 : i32 to index
    %c0_31 = arith.constant 0 : index
    %65 = vector.load %arg13[%64, %c0_31] : memref<2x32xf32, #tpu.memory_space<vmem>>, vector<1x32xf32>
    %66 = vector.broadcast %65 : vector<1x32xf32> to vector<8x32xf32>
    %67 = arith.addf %63, %66 : vector<8x32xf32>
    %68 = arith.addf %67, %3 : vector<8x32xf32>
    %c0_32 = arith.constant 0 : index
    %c0_33 = arith.constant 0 : index
    %c0_34 = arith.constant 0 : index
    %c0_35 = arith.constant 0 : index
    %69 = vector.load %arg2[%c0_32, %c0_33, %c0_34, %c0_35] : memref<1x1x8x32xf32, #tpu.memory_space<vmem>>, vector<1x1x8x32xf32>
    %70 = vector.shape_cast %69 : vector<1x1x8x32xf32> to vector<8x32xf32>
    %71 = arith.addf %68, %70 : vector<8x32xf32>
    %72 = math.tanh %71 : vector<8x32xf32>
    %73 = arith.negf %71 : vector<8x32xf32>
    %74 = math.exp %73 : vector<8x32xf32>
    %cst_36 = arith.constant 1.000000e+00 : f32
    %75 = vector.broadcast %cst_36 : f32 to vector<8x32xf32>
    %76 = arith.addf %75, %74 : vector<8x32xf32>
    %77 = arith.divf %75, %76 : vector<8x32xf32>
    %78 = arith.mulf %72, %77 : vector<8x32xf32>
    %79 = arith.truncf %78 : vector<8x32xf32> to vector<8x32xbf16>
    %c0_37 = arith.constant 0 : index
    %c0_38 = arith.constant 0 : index
    %c0_39 = arith.constant 0 : index
    %80 = vector.load %arg6[%c0_37, %c0_38, %c0_39] : memref<1x32x64xbf16, #tpu.memory_space<vmem>>, vector<1x32x64xbf16>
    %81 = vector.shape_cast %80 : vector<1x32x64xbf16> to vector<32x64xbf16>
    %cst_40 = arith.constant dense<0.000000e+00> : vector<8x64xf32>
    %82 = tpu.matmul %79, %81, %cst_40 {dimension_numbers = #tpu.dot_dimension_numbers<[1], [0], [0], [1], [0, 0, 1, 1], [], []>} : vector<8x32xbf16>, vector<32x64xbf16>, vector<8x64xf32> -> vector<8x64xf32>
    %83 = arith.index_cast %arg1 : i32 to index
    %c0_41 = arith.constant 0 : index
    %84 = vector.load %arg14[%83, %c0_41] : memref<2x64xf32, #tpu.memory_space<vmem>>, vector<1x64xf32>
    %85 = vector.broadcast %84 : vector<1x64xf32> to vector<8x64xf32>
    %86 = arith.addf %82, %85 : vector<8x64xf32>
    %87 = vector.extract_strided_slice %86 {offsets = [0, 0], sizes = [8, 32], strides = [1, 1]} : vector<8x64xf32> to vector<8x32xf32>
    %88 = arith.addf %87, %68 : vector<8x32xf32>
    %c0_42 = arith.constant 0 : index
    %c0_43 = arith.constant 0 : index
    %89 = vector.load %arg21[%c0_42, %c0_43] : memref<8x32xf32, #tpu.memory_space<vmem>>, vector<8x32xf32>
    %90 = vector.extract_strided_slice %86 {offsets = [0, 32], sizes = [8, 32], strides = [1, 1]} : vector<8x64xf32> to vector<8x32xf32>
    %91 = arith.addf %89, %90 : vector<8x32xf32>
    %c0_44 = arith.constant 0 : index
    %c0_45 = arith.constant 0 : index
    %92 = vector.load %arg20[%c0_44, %c0_45] : memref<8x32xf32, #tpu.memory_space<vmem>>, vector<8x32xf32>
    tpu.vector_store %arg20[%c0_44, %c0_45], %88 {strides = array<i32>} : memref<8x32xf32, #tpu.memory_space<vmem>>, vector<8x32xf32>,
    %c0_46 = arith.constant 0 : index
    %c0_47 = arith.constant 0 : index
    %93 = vector.load %arg21[%c0_46, %c0_47] : memref<8x32xf32, #tpu.memory_space<vmem>>, vector<8x32xf32>
    tpu.vector_store %arg21[%c0_46, %c0_47], %91 {strides = array<i32>} : memref<8x32xf32, #tpu.memory_space<vmem>>, vector<8x32xf32>,
    %c1_i32_48 = arith.constant 1 : i32
    %94 = arith.cmpi eq, %arg1, %c1_i32_48 : i32
    %95 = arith.extui %94 : i1 to i32
    %c0_i32_49 = arith.constant 0 : i32
    %96 = arith.cmpi ne, %95, %c0_i32_49 : i32
    scf.if %96 {
      %97 = arith.truncf %91 : vector<8x32xf32> to vector<8x32xbf16>
      %c0_50 = arith.constant 0 : index
      %c0_51 = arith.constant 0 : index
      %98 = vector.load %arg15[%c0_50, %c0_51] : memref<32x32xbf16, #tpu.memory_space<vmem>>, vector<32x32xbf16>
      %cst_52 = arith.constant dense<0.000000e+00> : vector<8x32xf32>
      %99 = tpu.matmul %97, %98, %cst_52 {dimension_numbers = #tpu.dot_dimension_numbers<[1], [0], [0], [1], [0, 0, 1, 1], [], []>} : vector<8x32xbf16>, vector<32x32xbf16>, vector<8x32xf32> -> vector<8x32xf32>
      %c0_53 = arith.constant 0 : index
      %c0_54 = arith.constant 0 : index
      %100 = vector.load %arg16[%c0_53, %c0_54] : memref<1x32xf32, #tpu.memory_space<vmem>>, vector<1x32xf32>
      %101 = vector.broadcast %100 : vector<1x32xf32> to vector<8x32xf32>
      %102 = arith.addf %99, %101 : vector<8x32xf32>
      %cst_55 = arith.constant 0.000000e+00 : f32
      %103 = vector.broadcast %cst_55 : f32 to vector<8x32xf32>
      %104 = arith.maximumf %102, %103 : vector<8x32xf32>
      %105 = arith.truncf %104 : vector<8x32xf32> to vector<8x32xbf16>
      %c0_56 = arith.constant 0 : index
      %c0_57 = arith.constant 0 : index
      %106 = vector.load %arg17[%c0_56, %c0_57] : memref<32x128xbf16, #tpu.memory_space<vmem>>, vector<32x128xbf16>
      %cst_58 = arith.constant dense<0.000000e+00> : vector<8x128xf32>
      %107 = tpu.matmul %105, %106, %cst_58 {dimension_numbers = #tpu.dot_dimension_numbers<[1], [0], [0], [1], [0, 0, 1, 1], [], []>} : vector<8x32xbf16>, vector<32x128xbf16>, vector<8x128xf32> -> vector<8x128xf32>
      %c0_59 = arith.constant 0 : index
      %c0_60 = arith.constant 0 : index
      %108 = vector.load %arg18[%c0_59, %c0_60] : memref<1x128xf32, #tpu.memory_space<vmem>>, vector<1x128xf32>
      %109 = vector.broadcast %108 : vector<1x128xf32> to vector<8x128xf32>
      %110 = arith.addf %107, %109 : vector<8x128xf32>
      %c0_61 = arith.constant 0 : index
      %c0_62 = arith.constant 0 : index
      %c0_63 = arith.constant 0 : index
      %111 = vector.load %arg7[%c0_61, %c0_62, %c0_63] : memref<1x8x128xf32, #tpu.memory_space<vmem>>, vector<1x8x128xf32>
      %112 = vector.shape_cast %111 : vector<1x8x128xf32> to vector<8x128xf32>
      %113 = arith.addf %110, %112 : vector<8x128xf32>
      %c0_64 = arith.constant 0 : index
      %c0_65 = arith.constant 0 : index
      %c0_66 = arith.constant 0 : index
      %114 = vector.load %arg19[%c0_64, %c0_65, %c0_66] : memref<1x8x128xf32, #tpu.memory_space<vmem>>, vector<1x8x128xf32>
      %115 = vector.shape_cast %114 : vector<1x8x128xf32> to vector<8x128xf32>
      %116 = vector.shape_cast %113 : vector<8x128xf32> to vector<1x8x128xf32>
      tpu.vector_store %arg19[%c0_64, %c0_65, %c0_66], %116 {strides = array<i32>} : memref<1x8x128xf32, #tpu.memory_space<vmem>>, vector<1x8x128xf32>,
    } else {
    }
    return
  }
  func.func @transform_0(%arg0: i32, %arg1: i32) -> (i32, i32, i32, i32) {
    %c0_i32 = arith.constant 0 : i32
    %c0_i32_0 = arith.constant 0 : i32
    %c0_i32_1 = arith.constant 0 : i32
    return %arg0, %arg1, %c0_i32, %c0_i32_0 : i32, i32, i32, i32
  }
  func.func @transform_1(%arg0: i32, %arg1: i32) -> (i32, i32, i32) {
    %c0_i32 = arith.constant 0 : i32
    %c0_i32_0 = arith.constant 0 : i32
    %c0_i32_1 = arith.constant 0 : i32
    return %arg1, %c0_i32, %c0_i32_0 : i32, i32, i32
  }
  func.func @transform_2(%arg0: i32, %arg1: i32) -> (i32, i32, i32) {
    %c0_i32 = arith.constant 0 : i32
    %c0_i32_0 = arith.constant 0 : i32
    %c0_i32_1 = arith.constant 0 : i32
    return %arg1, %c0_i32, %c0_i32_0 : i32, i32, i32
  }
  func.func @transform_3(%arg0: i32, %arg1: i32) -> (i32, i32, i32) {
    %c0_i32 = arith.constant 0 : i32
    %c0_i32_0 = arith.constant 0 : i32
    %c0_i32_1 = arith.constant 0 : i32
    return %arg1, %c0_i32, %c0_i32_0 : i32, i32, i32
  }
  func.func @transform_4(%arg0: i32, %arg1: i32) -> (i32, i32, i32) {
    %c0_i32 = arith.constant 0 : i32
    %c0_i32_0 = arith.constant 0 : i32
    %c0_i32_1 = arith.constant 0 : i32
    return %arg1, %c0_i32, %c0_i32_0 : i32, i32, i32
  }
  func.func @transform_5(%arg0: i32, %arg1: i32) -> (i32, i32, i32) {
    %c0_i32 = arith.constant 0 : i32
    %c0_i32_0 = arith.constant 0 : i32
    %c0_i32_1 = arith.constant 0 : i32
    return %arg0, %c0_i32, %c0_i32_0 : i32, i32, i32
  }
  func.func @transform_6(%arg0: i32, %arg1: i32) -> (i32, i32) {
    %c0_i32 = arith.constant 0 : i32
    %c0_i32_0 = arith.constant 0 : i32
    %c0_i32_1 = arith.constant 0 : i32
    return %c0_i32, %c0_i32_0 : i32, i32
  }
  func.func @transform_7(%arg0: i32, %arg1: i32) -> (i32, i32) {
    %c0_i32 = arith.constant 0 : i32
    %c0_i32_0 = arith.constant 0 : i32
    %c0_i32_1 = arith.constant 0 : i32
    return %c0_i32, %c0_i32_0 : i32, i32
  }
  func.func @transform_8(%arg0: i32, %arg1: i32) -> (i32, i32) {
    %c0_i32 = arith.constant 0 : i32
    %c0_i32_0 = arith.constant 0 : i32
    %c0_i32_1 = arith.constant 0 : i32
    return %c0_i32, %c0_i32_0 : i32, i32
  }
  func.func @transform_9(%arg0: i32, %arg1: i32) -> (i32, i32) {
    %c0_i32 = arith.constant 0 : i32
    %c0_i32_0 = arith.constant 0 : i32
    %c0_i32_1 = arith.constant 0 : i32
    return %c0_i32, %c0_i32_0 : i32, i32
  }
  func.func @transform_10(%arg0: i32, %arg1: i32) -> (i32, i32) {
    %c0_i32 = arith.constant 0 : i32
    %c0_i32_0 = arith.constant 0 : i32
    %c0_i32_1 = arith.constant 0 : i32
    return %c0_i32, %c0_i32_0 : i32, i32
  }
  func.func @transform_11(%arg0: i32, %arg1: i32) -> (i32, i32) {
    %c0_i32 = arith.constant 0 : i32
    %c0_i32_0 = arith.constant 0 : i32
    %c0_i32_1 = arith.constant 0 : i32
    return %c0_i32, %c0_i32_0 : i32, i32
  }
  func.func @transform_12(%arg0: i32, %arg1: i32) -> (i32, i32) {
    %c0_i32 = arith.constant 0 : i32
    %c0_i32_0 = arith.constant 0 : i32
    %c0_i32_1 = arith.constant 0 : i32
    return %c0_i32, %c0_i32_0 : i32, i32
  }
  func.func @transform_13(%arg0: i32, %arg1: i32) -> (i32, i32) {
    %c0_i32 = arith.constant 0 : i32
    %c0_i32_0 = arith.constant 0 : i32
    %c0_i32_1 = arith.constant 0 : i32
    return %c0_i32, %c0_i32_0 : i32, i32
  }
  func.func @transform_14(%arg0: i32, %arg1: i32) -> (i32, i32) {
    %c0_i32 = arith.constant 0 : i32
    %c0_i32_0 = arith.constant 0 : i32
    %c0_i32_1 = arith.constant 0 : i32
    return %c0_i32, %c0_i32_0 : i32, i32
  }
  func.func @transform_15(%arg0: i32, %arg1: i32) -> (i32, i32) {
    %c0_i32 = arith.constant 0 : i32
    %c0_i32_0 = arith.constant 0 : i32
    %c0_i32_1 = arith.constant 0 : i32
    return %c0_i32, %c0_i32_0 : i32, i32
  }
  func.func @transform_16(%arg0: i32, %arg1: i32) -> (i32, i32) {
    %c0_i32 = arith.constant 0 : i32
    %c0_i32_0 = arith.constant 0 : i32
    %c0_i32_1 = arith.constant 0 : i32
    return %c0_i32, %c0_i32_0 : i32, i32
  }
  func.func @transform_17(%arg0: i32, %arg1: i32) -> (i32, i32, i32) {
    %c0_i32 = arith.constant 0 : i32
    %c0_i32_0 = arith.constant 0 : i32
    %c0_i32_1 = arith.constant 0 : i32
    return %arg0, %c0_i32, %c0_i32_0 : i32, i32, i32
  }
}

</mosaic_0001>

<llo_original>
// kernel: tpu_custom_call.1
$region0: #{tpu_custom_call.1}
  #allocation0 [shape = 'u32[]', space=smem, size = 0x4, offset = 0x4, fixed_abs, tag = 'smem constant byte address 0x4 - core index']
  #allocation1 [shape = 'u32[144,128]{1,0:T(1,128)}', space=vmem, size = 0x12000, scoped, tag = 'internal scratch']
  #allocation2 [shape = 'f32[8,32]{1,0:T(8,128)}', space=vmem, size = 0x1000, scoped, tag = 'scratch operand']
  #allocation3 [shape = 'f32[8,32]{1,0:T(8,128)}', space=vmem, size = 0x1000, scoped, tag = 'scratch operand']
  #allocation4 [shape = 'f32[8,32]{1,0:T(8,128)}', space=vmem, size = 0x1000, scoped, tag = 'scratch operand']
  #allocation5 [shape = 'f32[8,32]{1,0:T(8,128)}', space=vmem, size = 0x1000, scoped, tag = 'scratch operand']
  %s0 = inlined_call_operand.vmem [shape: f32[2,2,8,32], index: 0, kind: input, shape index: {}]
  %s1 = inlined_call_operand.hbm [shape: bf16[2,8,32], index: 1, kind: input, shape index: {}]
  %s2 = inlined_call_operand.hbm [shape: bf16[2,8,32], index: 2, kind: input, shape index: {}]
  %s3 = inlined_call_operand.vmem [shape: bf16[2,32,32], index: 3, kind: input, shape index: {}]
  %s4 = inlined_call_operand.hbm [shape: bf16[2,32,64], index: 4, kind: input, shape index: {}]
  %s5 = inlined_call_operand.vmem [shape: f32[2,8,128], index: 5, kind: input, shape index: {}]
  %s6 = inlined_call_operand.vmem [shape: bf16[128,32], index: 6, kind: input, shape index: {}]
  %s7 = inlined_call_operand.hbm [shape: f32[1,32], index: 7, kind: input, shape index: {}]
  %s8 = inlined_call_operand.hbm [shape: f32[2,32], index: 8, kind: input, shape index: {}]
  %s9 = inlined_call_operand.hbm [shape: f32[2,32], index: 9, kind: input, shape index: {}]
  %s10 = inlined_call_operand.vmem [shape: f32[2,32], index: 10, kind: input, shape index: {}]
  %s11 = inlined_call_operand.vmem [shape: f32[2,32], index: 11, kind: input, shape index: {}]
  %s12 = inlined_call_operand.hbm [shape: f32[2,64], index: 12, kind: input, shape index: {}]
  %s13 = inlined_call_operand.vmem [shape: bf16[32,32], index: 13, kind: input, shape index: {}]
  %s14 = inlined_call_operand.vmem [shape: f32[1,32], index: 14, kind: input, shape index: {}]
  %s15 = inlined_call_operand.hbm [shape: bf16[32,128], index: 15, kind: input, shape index: {}]
  %s16 = inlined_call_operand.vmem [shape: f32[1,128], index: 16, kind: input, shape index: {}]
  %s17 = inlined_call_operand.hbm [shape: f32[2,8,128], index: 17, kind: output, shape index: {}]
  %s18 = sld [smem:[#allocation0]]
  $region148: #{tpu_custom_call.1} parent=0
    _
  %s20 = ssub.s32 1, %s18
  %s21 = scalar_select 0, %s20, %s18
  $region1: #{tpu_custom_call.1} parent=0
    #allocation6 [shape = 'u8[4096]{0}', space=vmem, size = 0x1000, scoped, tag = 'input window, operand 1']
    #allocation7 [shape = 's32[2]{0}', space=sflag, size = 0x8, scoped, tag = 'scoped memory for tpu_custom_call.1']
    #allocation8 [shape = 's32[2]{0}', space=sflag, size = 0x8, scoped, tag = 'scoped memory for tpu_custom_call.1']
    #allocation9 [shape = 'u8[4096]{0}', space=vmem, size = 0x1000, scoped, tag = 'input window, operand 2']
    #allocation10 [shape = 's32[2]{0}', space=sflag, size = 0x8, scoped, tag = 'scoped memory for tpu_custom_call.1']
    #allocation11 [shape = 'u8[16384]{0}', space=vmem, size = 0x4000, scoped, tag = 'input window, operand 4']
    #allocation12 [shape = 'u8[512]{0}', space=vmem, size = 0x400, scoped, tag = 'input window, operand 7, single buffered']
    #allocation13 [shape = 's32[1]{0}', space=sflag, size = 0x4, scoped, tag = 'scoped memory for tpu_custom_call.1']
    #allocation14 [shape = 'u8[1024]{0}', space=vmem, size = 0x400, scoped, tag = 'input window, operand 8, single buffered']
    #allocation15 [shape = 'u8[1024]{0}', space=vmem, size = 0x400, scoped, tag = 'input window, operand 9, single buffered']
    #allocation16 [shape = 's32[1]{0}', space=sflag, size = 0x4, scoped, tag = 'scoped memory for tpu_custom_call.1']
    #allocation17 [shape = 'u8[1024]{0}', space=vmem, size = 0x400, scoped, tag = 'input window, operand 12, single buffered']
    #allocation18 [shape = 'u8[8192]{0}', space=vmem, size = 0x2000, scoped, tag = 'input window, operand 15, single buffered']
    #allocation19 [shape = 's32[1]{0}', space=sflag, size = 0x4, scoped, tag = 'scoped memory for tpu_custom_call.1']
    #allocation20 [shape = 'u8[8192]{0}', space=vmem, size = 0x2000, scoped, tag = 'output window, operand 0']
    %22 = vsyncpa [#allocation7], 0
    %s23 = scalar_lea.sflag [#allocation7], 1
    %24 = vsyncpa %s23, 0
    %25 = vsyncpa [#allocation10], 0
    %s26 = scalar_lea.sflag [#allocation10], 1
    %27 = vsyncpa %s26, 0
    %28 = vsyncpa [#allocation13], 0
    %29 = vsyncpa [#allocation16], 0
    %30 = vsyncpa [#allocation19], 0
    %31 = vsyncpa [#allocation8], 0
    %s32 = scalar_lea.sflag [#allocation8], 1
    %33 = vsyncpa %s32, 0
    loop: start=0, step=1, limit=6
    $region2: #{tpu_custom_call.1} parent=1 // loop_pre_header
      _
    $region3: #{tpu_custom_call.1} parent=1 // loop_header
      %s35 = sphi 0, %s39
      %p36 = scmp.ge.s32.totalorder %s35, 6
      %s42 = sphi 0, %s54
      %s43 = sphi 0, %s50
      %s44 = sphi 0, %s42
      %s45 = sphi 0, %s43
      %s46 = sphi 0, %s44
      %s47 = sphi 0, %s45
      %s59 = sphi 0, %s61
      %s62 = sphi 0, %s59
      %s63 = sphi 0, %s62
      %s79 = sphi 0, %s63
      %s85 = sphi 0, %s87
      %s88 = sphi 0, %s85
      %s89 = sphi 0, %s88
      %s105 = sphi 0, %s89
      %s111 = sphi 0, %s113
      %s114 = sphi 0, %s111
      %s115 = sphi 0, %s114
      %s131 = sphi 0, %s115
      %s137 = sphi 0, %s139
      %s140 = sphi 0, %s137
      %s141 = sphi 0, %s140
      %s157 = sphi 0, %s141
      %s163 = sphi 0, %s165
      %s166 = sphi 0, %s163
      %s167 = sphi 0, %s166
      %s183 = sphi 0, %s167
      %s189 = sphi 0, %s191
      %s192 = sphi 0, %s189
      %s193 = sphi 0, %s192
      %s209 = sphi 0, %s193
      %s213 = sphi 0, %s213
      %s215 = sphi 0, %s213
      %s216 = sphi 0, %s215
      %s230 = sphi 0, %s216
      %s234 = sphi 0, %s234
      %s236 = sphi 0, %s234
      %s237 = sphi 0, %s236
      %s251 = sphi 0, %s237
      %s255 = sphi 0, %s255
      %s257 = sphi 0, %s255
      %s258 = sphi 0, %s257
      %s272 = sphi 0, %s258
      %s276 = sphi 0, %s276
      %s278 = sphi 0, %s276
      %s279 = sphi 0, %s278
      %s293 = sphi 0, %s279
      %s297 = sphi 0, %s297
      %s299 = sphi 0, %s297
      %s300 = sphi 0, %s299
      %s314 = sphi 0, %s300
      %s318 = sphi 0, %s318
      %s320 = sphi 0, %s318
      %s321 = sphi 0, %s320
      %s335 = sphi 0, %s321
      %s339 = sphi 0, %s339
      %s341 = sphi 0, %s339
      %s342 = sphi 0, %s341
      %s356 = sphi 0, %s342
      %s360 = sphi 0, %s360
      %s362 = sphi 0, %s360
      %s363 = sphi 0, %s362
      %s377 = sphi 0, %s363
      %s381 = sphi 0, %s381
      %s383 = sphi 0, %s381
      %s384 = sphi 0, %s383
      %s398 = sphi 0, %s384
      %s402 = sphi 0, %s402
      %s404 = sphi 0, %s402
      %s405 = sphi 0, %s404
      %s419 = sphi 0, %s405
      %s423 = sphi 0, %s423
      %s425 = sphi 0, %s423
      %s426 = sphi 0, %s425
      %s440 = sphi 0, %s426
      %s446 = sphi 0, %s448
      %s449 = sphi 0, %s446
      %s450 = sphi 0, %s449
      %s466 = sphi 0, %s450
    $region4: #{tpu_custom_call.1} parent=1 // loop_header_branch
      %38 = sbr.rel (%p36) target = $region8
    $region5: #{tpu_custom_call.1} parent=1 // loop_body
      %s40 = ssub.s32 %s35, 1
      %s41 = ssub.s32 %s35, 2
      %s48 = sadd.s32 1, %s43
      %p49 = scmp.ge.s32.totalorder %s48, 2
      %s50 = scalar_select %p49, 0, %s48
      %s51 = sadd.s32 1, %s42
      %s52 = scalar_select %p49, %s51, %s42
      %p53 = scmp.ge.s32.totalorder %s52, 2
      %s54 = scalar_select %p53, 0, %s52
      %s55 = ssub.s32 %s42, %s54
      %s56 = ssub.s32 %s43, %s50
      %s57 = sor.u32 %s55, %s56
      %p58 = scmp.eq.s32.totalorder %s57, 0
      %s60 = sadd.s32 %s59, 1
      %s61 = scalar_select %p58, %s59, %s60
      %p64 = pneg %p58
      %p65 = scmp.eq.s32.totalorder %s35, 3
      %p66 = por %p64, %p65
      %p67 = scmp.ne.s32.totalorder %s59, %s62
      %p68 = scmp.eq.s32.totalorder %s35, 0
      %p69 = por %p67, %p68
      %p70 = scmp.ne.s32.totalorder %s59, %s62
      %p71 = scmp.eq.s32.totalorder %s40, 3
      %p72 = por %p70, %p71
      %p73 = scmp.ne.s32.totalorder %s62, %s63
      %p74 = scmp.eq.s32.totalorder %s40, 0
      %p75 = por %p73, %p74
      %p76 = scmp.ne.s32.totalorder %s62, %s63
      %p77 = scmp.eq.s32.totalorder %s41, 3
      %p78 = por %p76, %p77
      %p80 = scmp.ne.s32.totalorder %s63, %s79
      %p81 = scmp.eq.s32.totalorder %s41, 0
      %p82 = por %p80, %p81
      %s83 = ssub.s32 %s43, %s50
      %p84 = scmp.eq.s32.totalorder %s83, 0
      %s86 = sadd.s32 %s85, 1
      %s87 = scalar_select %p84, %s85, %s86
      %p90 = pneg %p84
      %p91 = scmp.eq.s32.totalorder %s35, 3
      %p92 = por %p90, %p91
      %p93 = scmp.ne.s32.totalorder %s85, %s88
      %p94 = scmp.eq.s32.totalorder %s35, 0
      %p95 = por %p93, %p94
      %p96 = scmp.ne.s32.totalorder %s85, %s88
      %p97 = scmp.eq.s32.totalorder %s40, 3
      %p98 = por %p96, %p97
      %p99 = scmp.ne.s32.totalorder %s88, %s89
      %p100 = scmp.eq.s32.totalorder %s40, 0
      %p101 = por %p99, %p100
      %p102 = scmp.ne.s32.totalorder %s88, %s89
      %p103 = scmp.eq.s32.totalorder %s41, 3
      %p104 = por %p102, %p103
      %p106 = scmp.ne.s32.totalorder %s89, %s105
      %p107 = scmp.eq.s32.totalorder %s41, 0
      %p108 = por %p106, %p107
      %s109 = ssub.s32 %s43, %s50
      %p110 = scmp.eq.s32.totalorder %s109, 0
      %s112 = sadd.s32 %s111, 1
      %s113 = scalar_select %p110, %s111, %s112
      %p116 = pneg %p110
      %p117 = scmp.eq.s32.totalorder %s35, 3
      %p118 = por %p116, %p117
      %p119 = scmp.ne.s32.totalorder %s111, %s114
      %p120 = scmp.eq.s32.totalorder %s35, 0
      %p121 = por %p119, %p120
      %p122 = scmp.ne.s32.totalorder %s111, %s114
      %p123 = scmp.eq.s32.totalorder %s40, 3
      %p124 = por %p122, %p123
      %p125 = scmp.ne.s32.totalorder %s114, %s115
      %p126 = scmp.eq.s32.totalorder %s40, 0
      %p127 = por %p125, %p126
      %p128 = scmp.ne.s32.totalorder %s114, %s115
      %p129 = scmp.eq.s32.totalorder %s41, 3
      %p130 = por %p128, %p129
      %p132 = scmp.ne.s32.totalorder %s115, %s131
      %p133 = scmp.eq.s32.totalorder %s41, 0
      %p134 = por %p132, %p133
      %s135 = ssub.s32 %s43, %s50
      %p136 = scmp.eq.s32.totalorder %s135, 0
      %s138 = sadd.s32 %s137, 1
      %s139 = scalar_select %p136, %s137, %s138
      %p142 = pneg %p136
      %p143 = scmp.eq.s32.totalorder %s35, 3
      %p144 = por %p142, %p143
      %p145 = scmp.ne.s32.totalorder %s137, %s140
      %p146 = scmp.eq.s32.totalorder %s35, 0
      %p147 = por %p145, %p146
      %p148 = scmp.ne.s32.totalorder %s137, %s140
      %p149 = scmp.eq.s32.totalorder %s40, 3
      %p150 = por %p148, %p149
      %p151 = scmp.ne.s32.totalorder %s140, %s141
      %p152 = scmp.eq.s32.totalorder %s40, 0
      %p153 = por %p151, %p152
      %p154 = scmp.ne.s32.totalorder %s140, %s141
      %p155 = scmp.eq.s32.totalorder %s41, 3
      %p156 = por %p154, %p155
      %p158 = scmp.ne.s32.totalorder %s141, %s157
      %p159 = scmp.eq.s32.totalorder %s41, 0
      %p160 = por %p158, %p159
      %s161 = ssub.s32 %s43, %s50
      %p162 = scmp.eq.s32.totalorder %s161, 0
      %s164 = sadd.s32 %s163, 1
      %s165 = scalar_select %p162, %s163, %s164
      %p168 = pneg %p162
      %p169 = scmp.eq.s32.totalorder %s35, 3
      %p170 = por %p168, %p169
      %p171 = scmp.ne.s32.totalorder %s163, %s166
      %p172 = scmp.eq.s32.totalorder %s35, 0
      %p173 = por %p171, %p172
      %p174 = scmp.ne.s32.totalorder %s163, %s166
      %p175 = scmp.eq.s32.totalorder %s40, 3
      %p176 = por %p174, %p175
      %p177 = scmp.ne.s32.totalorder %s166, %s167
      %p178 = scmp.eq.s32.totalorder %s40, 0
      %p179 = por %p177, %p178
      %p180 = scmp.ne.s32.totalorder %s166, %s167
      %p181 = scmp.eq.s32.totalorder %s41, 3
      %p182 = por %p180, %p181
      %p184 = scmp.ne.s32.totalorder %s167, %s183
      %p185 = scmp.eq.s32.totalorder %s41, 0
      %p186 = por %p184, %p185
      %s187 = ssub.s32 %s42, %s54
      %p188 = scmp.eq.s32.totalorder %s187, 0
      %s190 = sadd.s32 %s189, 1
      %s191 = scalar_select %p188, %s189, %s190
      %p194 = pneg %p188
      %p195 = scmp.eq.s32.totalorder %s35, 3
      %p196 = por %p194, %p195
      %p197 = scmp.ne.s32.totalorder %s189, %s192
      %p198 = scmp.eq.s32.totalorder %s35, 0
      %p199 = por %p197, %p198
      %p200 = scmp.ne.s32.totalorder %s189, %s192
      %p201 = scmp.eq.s32.totalorder %s40, 3
      %p202 = por %p200, %p201
      %p203 = scmp.ne.s32.totalorder %s192, %s193
      %p204 = scmp.eq.s32.totalorder %s40, 0
      %p205 = por %p203, %p204
      %p206 = scmp.ne.s32.totalorder %s192, %s193
      %p207 = scmp.eq.s32.totalorder %s41, 3
      %p208 = por %p206, %p207
      %p210 = scmp.ne.s32.totalorder %s193, %s209
      %p211 = scmp.eq.s32.totalorder %s41, 0
      %p212 = por %p210, %p211
      %s214 = sadd.s32 %s213, 1
      %p217 = scmp.eq.s32.totalorder %s35, 3
      %p218 = scmp.ne.s32.totalorder %s213, %s215
      %p219 = scmp.eq.s32.totalorder %s35, 0
      %p220 = por %p218, %p219
      %p221 = scmp.ne.s32.totalorder %s213, %s215
      %p222 = scmp.eq.s32.totalorder %s40, 3
      %p223 = por %p221, %p222
      %p224 = scmp.ne.s32.totalorder %s215, %s216
      %p225 = scmp.eq.s32.totalorder %s40, 0
      %p226 = por %p224, %p225
      %p227 = scmp.ne.s32.totalorder %s215, %s216
      %p228 = scmp.eq.s32.totalorder %s41, 3
      %p229 = por %p227, %p228
      %p231 = scmp.ne.s32.totalorder %s216, %s230
      %p232 = scmp.eq.s32.totalorder %s41, 0
      %p233 = por %p231, %p232
      %s235 = sadd.s32 %s234, 1
      %p238 = scmp.eq.s32.totalorder %s35, 3
      %p239 = scmp.ne.s32.totalorder %s234, %s236
      %p240 = scmp.eq.s32.totalorder %s35, 0
      %p241 = por %p239, %p240
      %p242 = scmp.ne.s32.totalorder %s234, %s236
      %p243 = scmp.eq.s32.totalorder %s40, 3
      %p244 = por %p242, %p243
      %p245 = scmp.ne.s32.totalorder %s236, %s237
      %p246 = scmp.eq.s32.totalorder %s40, 0
      %p247 = por %p245, %p246
      %p248 = scmp.ne.s32.totalorder %s236, %s237
      %p249 = scmp.eq.s32.totalorder %s41, 3
      %p250 = por %p248, %p249
      %p252 = scmp.ne.s32.totalorder %s237, %s251
      %p253 = scmp.eq.s32.totalorder %s41, 0
      %p254 = por %p252, %p253
      %s256 = sadd.s32 %s255, 1
      %p259 = scmp.eq.s32.totalorder %s35, 3
      %p260 = scmp.ne.s32.totalorder %s255, %s257
      %p261 = scmp.eq.s32.totalorder %s35, 0
      %p262 = por %p260, %p261
      %p263 = scmp.ne.s32.totalorder %s255, %s257
      %p264 = scmp.eq.s32.totalorder %s40, 3
      %p265 = por %p263, %p264
      %p266 = scmp.ne.s32.totalorder %s257, %s258
      %p267 = scmp.eq.s32.totalorder %s40, 0
      %p268 = por %p266, %p267
      %p269 = scmp.ne.s32.totalorder %s257, %s258
      %p270 = scmp.eq.s32.totalorder %s41, 3
      %p271 = por %p269, %p270
      %p273 = scmp.ne.s32.totalorder %s258, %s272
      %p274 = scmp.eq.s32.totalorder %s41, 0
      %p275 = por %p273, %p274
      %s277 = sadd.s32 %s276, 1
      %p280 = scmp.eq.s32.totalorder %s35, 3
      %p281 = scmp.ne.s32.totalorder %s276, %s278
      %p282 = scmp.eq.s32.totalorder %s35, 0
      %p283 = por %p281, %p282
      %p284 = scmp.ne.s32.totalorder %s276, %s278
      %p285 = scmp.eq.s32.totalorder %s40, 3
      %p286 = por %p284, %p285
      %p287 = scmp.ne.s32.totalorder %s278, %s279
      %p288 = scmp.eq.s32.totalorder %s40, 0
      %p289 = por %p287, %p288
      %p290 = scmp.ne.s32.totalorder %s278, %s279
      %p291 = scmp.eq.s32.totalorder %s41, 3
      %p292 = por %p290, %p291
      %p294 = scmp.ne.s32.totalorder %s279, %s293
      %p295 = scmp.eq.s32.totalorder %s41, 0
      %p296 = por %p294, %p295
      %s298 = sadd.s32 %s297, 1
      %p301 = scmp.eq.s32.totalorder %s35, 3
      %p302 = scmp.ne.s32.totalorder %s297, %s299
      %p303 = scmp.eq.s32.totalorder %s35, 0
      %p304 = por %p302, %p303
      %p305 = scmp.ne.s32.totalorder %s297, %s299
      %p306 = scmp.eq.s32.totalorder %s40, 3
      %p307 = por %p305, %p306
      %p308 = scmp.ne.s32.totalorder %s299, %s300
      %p309 = scmp.eq.s32.totalorder %s40, 0
      %p310 = por %p308, %p309
      %p311 = scmp.ne.s32.totalorder %s299, %s300
      %p312 = scmp.eq.s32.totalorder %s41, 3
      %p313 = por %p311, %p312
      %p315 = scmp.ne.s32.totalorder %s300, %s314
      %p316 = scmp.eq.s32.totalorder %s41, 0
      %p317 = por %p315, %p316
      %s319 = sadd.s32 %s318, 1
      %p322 = scmp.eq.s32.totalorder %s35, 3
      %p323 = scmp.ne.s32.totalorder %s318, %s320
      %p324 = scmp.eq.s32.totalorder %s35, 0
      %p325 = por %p323, %p324
      %p326 = scmp.ne.s32.totalorder %s318, %s320
      %p327 = scmp.eq.s32.totalorder %s40, 3
      %p328 = por %p326, %p327
      %p329 = scmp.ne.s32.totalorder %s320, %s321
      %p330 = scmp.eq.s32.totalorder %s40, 0
      %p331 = por %p329, %p330
      %p332 = scmp.ne.s32.totalorder %s320, %s321
      %p333 = scmp.eq.s32.totalorder %s41, 3
      %p334 = por %p332, %p333
      %p336 = scmp.ne.s32.totalorder %s321, %s335
      %p337 = scmp.eq.s32.totalorder %s41, 0
      %p338 = por %p336, %p337
      %s340 = sadd.s32 %s339, 1
      %p343 = scmp.eq.s32.totalorder %s35, 3
      %p344 = scmp.ne.s32.totalorder %s339, %s341
      %p345 = scmp.eq.s32.totalorder %s35, 0
      %p346 = por %p344, %p345
      %p347 = scmp.ne.s32.totalorder %s339, %s341
      %p348 = scmp.eq.s32.totalorder %s40, 3
      %p349 = por %p347, %p348
      %p350 = scmp.ne.s32.totalorder %s341, %s342
      %p351 = scmp.eq.s32.totalorder %s40, 0
      %p352 = por %p350, %p351
      %p353 = scmp.ne.s32.totalorder %s341, %s342
      %p354 = scmp.eq.s32.totalorder %s41, 3
      %p355 = por %p353, %p354
      %p357 = scmp.ne.s32.totalorder %s342, %s356
      %p358 = scmp.eq.s32.totalorder %s41, 0
      %p359 = por %p357, %p358
      %s361 = sadd.s32 %s360, 1
      %p364 = scmp.eq.s32.totalorder %s35, 3
      %p365 = scmp.ne.s32.totalorder %s360, %s362
      %p366 = scmp.eq.s32.totalorder %s35, 0
      %p367 = por %p365, %p366
      %p368 = scmp.ne.s32.totalorder %s360, %s362
      %p369 = scmp.eq.s32.totalorder %s40, 3
      %p370 = por %p368, %p369
      %p371 = scmp.ne.s32.totalorder %s362, %s363
      %p372 = scmp.eq.s32.totalorder %s40, 0
      %p373 = por %p371, %p372
      %p374 = scmp.ne.s32.totalorder %s362, %s363
      %p375 = scmp.eq.s32.totalorder %s41, 3
      %p376 = por %p374, %p375
      %p378 = scmp.ne.s32.totalorder %s363, %s377
      %p379 = scmp.eq.s32.totalorder %s41, 0
      %p380 = por %p378, %p379
      %s382 = sadd.s32 %s381, 1
      %p385 = scmp.eq.s32.totalorder %s35, 3
      %p386 = scmp.ne.s32.totalorder %s381, %s383
      %p387 = scmp.eq.s32.totalorder %s35, 0
      %p388 = por %p386, %p387
      %p389 = scmp.ne.s32.totalorder %s381, %s383
      %p390 = scmp.eq.s32.totalorder %s40, 3
      %p391 = por %p389, %p390
      %p392 = scmp.ne.s32.totalorder %s383, %s384
      %p393 = scmp.eq.s32.totalorder %s40, 0
      %p394 = por %p392, %p393
      %p395 = scmp.ne.s32.totalorder %s383, %s384
      %p396 = scmp.eq.s32.totalorder %s41, 3
      %p397 = por %p395, %p396
      %p399 = scmp.ne.s32.totalorder %s384, %s398
      %p400 = scmp.eq.s32.totalorder %s41, 0
      %p401 = por %p399, %p400
      %s403 = sadd.s32 %s402, 1
      %p406 = scmp.eq.s32.totalorder %s35, 3
      %p407 = scmp.ne.s32.totalorder %s402, %s404
      %p408 = scmp.eq.s32.totalorder %s35, 0
      %p409 = por %p407, %p408
      %p410 = scmp.ne.s32.totalorder %s402, %s404
      %p411 = scmp.eq.s32.totalorder %s40, 3
      %p412 = por %p410, %p411
      %p413 = scmp.ne.s32.totalorder %s404, %s405
      %p414 = scmp.eq.s32.totalorder %s40, 0
      %p415 = por %p413, %p414
      %p416 = scmp.ne.s32.totalorder %s404, %s405
      %p417 = scmp.eq.s32.totalorder %s41, 3
      %p418 = por %p416, %p417
      %p420 = scmp.ne.s32.totalorder %s405, %s419
      %p421 = scmp.eq.s32.totalorder %s41, 0
      %p422 = por %p420, %p421
      %s424 = sadd.s32 %s423, 1
      %p427 = scmp.eq.s32.totalorder %s35, 3
      %p428 = scmp.ne.s32.totalorder %s423, %s425
      %p429 = scmp.eq.s32.totalorder %s35, 0
      %p430 = por %p428, %p429
      %p431 = scmp.ne.s32.totalorder %s423, %s425
      %p432 = scmp.eq.s32.totalorder %s40, 3
      %p433 = por %p431, %p432
      %p434 = scmp.ne.s32.totalorder %s425, %s426
      %p435 = scmp.eq.s32.totalorder %s40, 0
      %p436 = por %p434, %p435
      %p437 = scmp.ne.s32.totalorder %s425, %s426
      %p438 = scmp.eq.s32.totalorder %s41, 3
      %p439 = por %p437, %p438
      %p441 = scmp.ne.s32.totalorder %s426, %s440
      %p442 = scmp.eq.s32.totalorder %s41, 0
      %p443 = por %p441, %p442
      %s444 = ssub.s32 %s42, %s54
      %p445 = scmp.eq.s32.totalorder %s444, 0
      %s447 = sadd.s32 %s446, 1
      %s448 = scalar_select %p445, %s446, %s447
      %p451 = pneg %p445
      %p452 = scmp.eq.s32.totalorder %s35, 3
      %p453 = por %p451, %p452
      %p454 = scmp.ne.s32.totalorder %s446, %s449
      %p455 = scmp.eq.s32.totalorder %s35, 0
      %p456 = por %p454, %p455
      %p457 = scmp.ne.s32.totalorder %s446, %s449
      %p458 = scmp.eq.s32.totalorder %s40, 3
      %p459 = por %p457, %p458
      %p460 = scmp.ne.s32.totalorder %s449, %s450
      %p461 = scmp.eq.s32.totalorder %s40, 0
      %p462 = por %p460, %p461
      %p463 = scmp.ne.s32.totalorder %s449, %s450
      %p464 = scmp.eq.s32.totalorder %s41, 3
      %p465 = por %p463, %p464
      %p467 = scmp.ne.s32.totalorder %s450, %s466
      %p468 = scmp.eq.s32.totalorder %s41, 0
      %p469 = por %p467, %p468
      %p470 = scmp.le.s32.totalorder 1, %s35
      %p471 = scmp.lt.s32.totalorder %s35, 5
      %p472 = pnand %p470, %p471
      %p473 = pneg %p472
      // Predicated region
      $region9: #{tpu_custom_call.1} parent=5 // pred_check
        _
      $region10: #{tpu_custom_call.1} parent=5 // pred_check_branch
        %475 = sbr.rel (%p472) target = $region12
      $region11: #{tpu_custom_call.1} parent=5 // pred_region
        %s476 = ssub.s32 %s35, 1
        // Predicated region
        $region13: #{tpu_custom_call.1} parent=11 // pred_check
          %p477 = pneg %p226
        $region14: #{tpu_custom_call.1} parent=11 // pred_check_branch
          %479 = sbr.rel (%p477) target = $region16
        $region15: #{tpu_custom_call.1} parent=11 // pred_region
          _
        $region16: #{tpu_custom_call.1} parent=11 // pred_fallthru
          _
        // Predicated region
        $region17: #{tpu_custom_call.1} parent=11 // pred_check
          %p480 = pneg %p247
        $region18: #{tpu_custom_call.1} parent=11 // pred_check_branch
          %482 = sbr.rel (%p480) target = $region20
        $region19: #{tpu_custom_call.1} parent=11 // pred_region
          %s484 = ssub.s32 16, 16
          %485 = vsyncadd [#allocation13], %s484
          %s487 = sshll.u32 [#allocation12], 4
          %s488 = int_to_ptr.vmem [resolvable:$true] %s487
          %490 = dma.hbm_to_vmem [thread:$0]  %s7, 16, %s488, [#allocation13]
        $region20: #{tpu_custom_call.1} parent=11 // pred_fallthru
          _
        // Predicated region
        $region21: #{tpu_custom_call.1} parent=11 // pred_check
          %p491 = pneg %p268
        $region22: #{tpu_custom_call.1} parent=11 // pred_check_branch
          %493 = sbr.rel (%p491) target = $region24
        $region23: #{tpu_custom_call.1} parent=11 // pred_region
          %s495 = ssub.s32 32, 32
          %496 = vsyncadd [#allocation13], %s495
          %s498 = sshll.u32 [#allocation14], 4
          %s499 = int_to_ptr.vmem [resolvable:$true] %s498
          %501 = dma.hbm_to_vmem [thread:$0]  %s8, 32, %s499, [#allocation13]
        $region24: #{tpu_custom_call.1} parent=11 // pred_fallthru
          _
        // Predicated region
        $region25: #{tpu_custom_call.1} parent=11 // pred_check
          %p502 = pneg %p289
        $region26: #{tpu_custom_call.1} parent=11 // pred_check_branch
          %504 = sbr.rel (%p502) target = $region28
        $region27: #{tpu_custom_call.1} parent=11 // pred_region
          %s506 = ssub.s32 32, 32
          %507 = vsyncadd [#allocation16], %s506
          %s509 = sshll.u32 [#allocation15], 4
          %s510 = int_to_ptr.vmem [resolvable:$true] %s509
          %512 = dma.hbm_to_vmem [thread:$0]  %s9, 32, %s510, [#allocation16]
        $region28: #{tpu_custom_call.1} parent=11 // pred_fallthru
          _
        // Predicated region
        $region29: #{tpu_custom_call.1} parent=11 // pred_check
          %p513 = pneg %p310
        $region30: #{tpu_custom_call.1} parent=11 // pred_check_branch
          %515 = sbr.rel (%p513) target = $region32
        $region31: #{tpu_custom_call.1} parent=11 // pred_region
          _
        $region32: #{tpu_custom_call.1} parent=11 // pred_fallthru
          _
        // Predicated region
        $region33: #{tpu_custom_call.1} parent=11 // pred_check
          %p516 = pneg %p331
        $region34: #{tpu_custom_call.1} parent=11 // pred_check_branch
          %518 = sbr.rel (%p516) target = $region36
        $region35: #{tpu_custom_call.1} parent=11 // pred_region
          _
        $region36: #{tpu_custom_call.1} parent=11 // pred_fallthru
          _
        // Predicated region
        $region37: #{tpu_custom_call.1} parent=11 // pred_check
          %p519 = pneg %p352
        $region38: #{tpu_custom_call.1} parent=11 // pred_check_branch
          %521 = sbr.rel (%p519) target = $region40
        $region39: #{tpu_custom_call.1} parent=11 // pred_region
          %s523 = ssub.s32 32, 32
          %524 = vsyncadd [#allocation16], %s523
          %s526 = sshll.u32 [#allocation17], 4
          %s527 = int_to_ptr.vmem [resolvable:$true] %s526
          %529 = dma.hbm_to_vmem [thread:$0]  %s12, 32, %s527, [#allocation16]
        $region40: #{tpu_custom_call.1} parent=11 // pred_fallthru
          _
        // Predicated region
        $region41: #{tpu_custom_call.1} parent=11 // pred_check
          %p530 = pneg %p373
        $region42: #{tpu_custom_call.1} parent=11 // pred_check_branch
          %532 = sbr.rel (%p530) target = $region44
        $region43: #{tpu_custom_call.1} parent=11 // pred_region
          _
        $region44: #{tpu_custom_call.1} parent=11 // pred_fallthru
          _
        // Predicated region
        $region45: #{tpu_custom_call.1} parent=11 // pred_check
          %p533 = pneg %p394
        $region46: #{tpu_custom_call.1} parent=11 // pred_check_branch
          %535 = sbr.rel (%p533) target = $region48
        $region47: #{tpu_custom_call.1} parent=11 // pred_region
          _
        $region48: #{tpu_custom_call.1} parent=11 // pred_fallthru
          _
        // Predicated region
        $region49: #{tpu_custom_call.1} parent=11 // pred_check
          %p536 = pneg %p415
        $region50: #{tpu_custom_call.1} parent=11 // pred_check_branch
          %538 = sbr.rel (%p536) target = $region52
        $region51: #{tpu_custom_call.1} parent=11 // pred_region
          %s540 = ssub.s32 256, 256
          %541 = vsyncadd [#allocation19], %s540
          %s542 = sshll.u32 [#allocation18], 4
          %s543 = int_to_ptr.vmem [resolvable:$true] %s542
          %548 = dma.hbm_to_vmem [thread:$0]  %s15, 256, %s543, [#allocation19], 64, 64, 4
        $region52: #{tpu_custom_call.1} parent=11 // pred_fallthru
          _
        // Predicated region
        $region53: #{tpu_custom_call.1} parent=11 // pred_check
          %p549 = pneg %p436
        $region54: #{tpu_custom_call.1} parent=11 // pred_check_branch
          %551 = sbr.rel (%p549) target = $region56
        $region55: #{tpu_custom_call.1} parent=11 // pred_region
          _
        $region56: #{tpu_custom_call.1} parent=11 // pred_fallthru
          _
      $region12: #{tpu_custom_call.1} parent=5 // pred_fallthru
        _
      %p552 = scmp.lt.s32.totalorder %s35, 4
      // Predicated region
      $region57: #{tpu_custom_call.1} parent=5 // pred_check
        %p553 = pneg %p552
      $region58: #{tpu_custom_call.1} parent=5 // pred_check_branch
        %555 = sbr.rel (%p553) target = $region60
      $region59: #{tpu_custom_call.1} parent=5 // pred_region
        // Predicated region
        $region61: #{tpu_custom_call.1} parent=59 // pred_check
          %p556 = pneg %p69
        $region62: #{tpu_custom_call.1} parent=59 // pred_check_branch
          %558 = sbr.rel (%p556) target = $region64
        $region63: #{tpu_custom_call.1} parent=59 // pred_region
          %p559 = scmp.lt.s32.totalorder %s42, 1
          %s560 = scalar_select %p559, %s42, 1
          %p561 = scmp.lt.s32.totalorder %s43, 1
          %s562 = scalar_select %p561, %s43, 1
          %s563 = smul.addr %s560, 2
          %s564 = sadd.s32 %s562, %s563
          %s565 = smul.addr %s564, 8
          %s566 = scalar_lea.vmem %s0, %s565
        $region64: #{tpu_custom_call.1} parent=59 // pred_fallthru
          _
        // Predicated region
        $region65: #{tpu_custom_call.1} parent=59 // pred_check
          %p567 = pneg %p95
        $region66: #{tpu_custom_call.1} parent=59 // pred_check_branch
          %569 = sbr.rel (%p567) target = $region68
        $region67: #{tpu_custom_call.1} parent=59 // pred_region
          %s570 = sand.u32 %s85, 1
          %s571 = scalar_lea.sflag [#allocation7], %s570
          %s572 = sand.u32 %s85, 1
          %s573 = smul.addr %s572, 4
          %s574 = scalar_lea.vmem [#allocation6], %s573
          %s576 = ssub.s32 64, 64
          %577 = vsyncadd %s571, %s576
          %s578 = smul.addr %s43, 64
          %s579 = scalar_lea.hbm %s1, %s578
          %s581 = sshll.u32 %s574, 4
          %s582 = int_to_ptr.vmem [resolvable:$true] %s581
          %584 = dma.hbm_to_vmem [thread:$0]  %s579, 64, %s582, %s571
        $region68: #{tpu_custom_call.1} parent=59 // pred_fallthru
          _
        // Predicated region
        $region69: #{tpu_custom_call.1} parent=59 // pred_check
          %p585 = pneg %p121
        $region70: #{tpu_custom_call.1} parent=59 // pred_check_branch
          %587 = sbr.rel (%p585) target = $region72
        $region71: #{tpu_custom_call.1} parent=59 // pred_region
          %s588 = sand.u32 %s35, 1
          %s589 = scalar_lea.sflag [#allocation10], %s588
          %s590 = sand.u32 %s111, 1
          %s591 = smul.addr %s590, 4
          %s592 = scalar_lea.vmem [#allocation9], %s591
          %s594 = ssub.s32 64, 64
          %595 = vsyncadd %s589, %s594
          %s596 = smul.addr %s43, 64
          %s597 = scalar_lea.hbm %s2, %s596
          %s599 = sshll.u32 %s592, 4
          %s600 = int_to_ptr.vmem [resolvable:$true] %s599
          %602 = dma.hbm_to_vmem [thread:$0]  %s597, 64, %s600, %s589
        $region72: #{tpu_custom_call.1} parent=59 // pred_fallthru
          _
        // Predicated region
        $region73: #{tpu_custom_call.1} parent=59 // pred_check
          %p603 = pneg %p147
        $region74: #{tpu_custom_call.1} parent=59 // pred_check_branch
          %605 = sbr.rel (%p603) target = $region76
        $region75: #{tpu_custom_call.1} parent=59 // pred_region
          %p606 = scmp.lt.s32.totalorder %s43, 1
          %s607 = scalar_select %p606, %s43, 1
          %s608 = smul.addr %s607, 4
          %s609 = smul.addr %s608, 4
          %s610 = scalar_lea.vmem %s3, %s609
        $region76: #{tpu_custom_call.1} parent=59 // pred_fallthru
          _
        // Predicated region
        $region77: #{tpu_custom_call.1} parent=59 // pred_check
          %p611 = pneg %p173
        $region78: #{tpu_custom_call.1} parent=59 // pred_check_branch
          %613 = sbr.rel (%p611) target = $region80
        $region79: #{tpu_custom_call.1} parent=59 // pred_region
          %s614 = sand.u32 %s35, 1
          %s615 = scalar_lea.sflag [#allocation10], %s614
          %s616 = sand.u32 %s163, 1
          %s617 = smul.addr %s616, 16
          %s618 = scalar_lea.vmem [#allocation11], %s617
          %s620 = ssub.s32 256, 256
          %621 = vsyncadd %s615, %s620
          %s622 = smul.addr %s43, 4
          %s623 = smul.addr %s622, 64
          %s624 = scalar_lea.hbm %s4, %s623
          %s625 = sshll.u32 %s618, 4
          %s626 = int_to_ptr.vmem [resolvable:$true] %s625
          %631 = dma.hbm_to_vmem [thread:$0]  %s624, 256, %s626, %s615, 64, 64, 4
        $region80: #{tpu_custom_call.1} parent=59 // pred_fallthru
          _
        // Predicated region
        $region81: #{tpu_custom_call.1} parent=59 // pred_check
          %p632 = pneg %p199
        $region82: #{tpu_custom_call.1} parent=59 // pred_check_branch
          %634 = sbr.rel (%p632) target = $region84
        $region83: #{tpu_custom_call.1} parent=59 // pred_region
          %p635 = scmp.lt.s32.totalorder %s42, 1
          %s636 = scalar_select %p635, %s42, 1
          %s637 = smul.addr %s636, 8
          %s638 = scalar_lea.vmem %s5, %s637
        $region84: #{tpu_custom_call.1} parent=59 // pred_fallthru
          _
      $region60: #{tpu_custom_call.1} parent=5 // pred_fallthru
        _
      %p639 = scmp.le.s32.totalorder 1, %s35
      %p640 = scmp.lt.s32.totalorder %s35, 5
      %p641 = pnand %p639, %p640
      %p642 = pneg %p641
      // Predicated region
      $region85: #{tpu_custom_call.1} parent=5 // pred_check
        _
      $region86: #{tpu_custom_call.1} parent=5 // pred_check_branch
        %644 = sbr.rel (%p641) target = $region88
      $region87: #{tpu_custom_call.1} parent=5 // pred_region
        %s645 = ssub.s32 %s35, 1
        %s646 = sand.u32 %s88, 1
        %s647 = scalar_lea.sflag [#allocation7], %s646
        %s648 = sand.u32 %s88, 1
        %s649 = smul.addr %s648, 4
        %s650 = scalar_lea.vmem [#allocation6], %s649
        // Predicated region
        $region89: #{tpu_custom_call.1} parent=87 // pred_check
          %p651 = pneg %p101
        $region90: #{tpu_custom_call.1} parent=87 // pred_check_branch
          %653 = sbr.rel (%p651) target = $region92
        $region91: #{tpu_custom_call.1} parent=87 // pred_region
          %654 = dma.done %s647, 64
        $region92: #{tpu_custom_call.1} parent=87 // pred_fallthru
          _
        %s655 = sand.u32 %s40, 1
        %s656 = scalar_lea.sflag [#allocation10], %s655
        %s657 = sand.u32 %s114, 1
        %s658 = smul.addr %s657, 4
        %s659 = scalar_lea.vmem [#allocation9], %s658
        // Predicated region
        $region93: #{tpu_custom_call.1} parent=87 // pred_check
          %p660 = pneg %p127
        $region94: #{tpu_custom_call.1} parent=87 // pred_check_branch
          %662 = sbr.rel (%p660) target = $region96
        $region95: #{tpu_custom_call.1} parent=87 // pred_region
          %663 = dma.done %s656, 64
        $region96: #{tpu_custom_call.1} parent=87 // pred_fallthru
          _
        %s664 = sand.u32 %s40, 1
        %s665 = scalar_lea.sflag [#allocation10], %s664
        %s666 = sand.u32 %s166, 1
        %s667 = smul.addr %s666, 16
        %s668 = scalar_lea.vmem [#allocation11], %s667
        // Predicated region
        $region97: #{tpu_custom_call.1} parent=87 // pred_check
          %p669 = pneg %p179
        $region98: #{tpu_custom_call.1} parent=87 // pred_check_branch
          %671 = sbr.rel (%p669) target = $region100
        $region99: #{tpu_custom_call.1} parent=87 // pred_region
          %672 = dma.done %s665, 256
        $region100: #{tpu_custom_call.1} parent=87 // pred_fallthru
          _
        // Predicated region
        $region101: #{tpu_custom_call.1} parent=87 // pred_check
          %p673 = pneg %p247
        $region102: #{tpu_custom_call.1} parent=87 // pred_check_branch
          %675 = sbr.rel (%p673) target = $region104
        $region103: #{tpu_custom_call.1} parent=87 // pred_region
          %676 = dma.done [#allocation13], 16
        $region104: #{tpu_custom_call.1} parent=87 // pred_fallthru
          _
        // Predicated region
        $region105: #{tpu_custom_call.1} parent=87 // pred_check
          %p677 = pneg %p268
        $region106: #{tpu_custom_call.1} parent=87 // pred_check_branch
          %679 = sbr.rel (%p677) target = $region108
        $region107: #{tpu_custom_call.1} parent=87 // pred_region
          %680 = dma.done [#allocation13], 32
        $region108: #{tpu_custom_call.1} parent=87 // pred_fallthru
          _
        // Predicated region
        $region109: #{tpu_custom_call.1} parent=87 // pred_check
          %p681 = pneg %p289
        $region110: #{tpu_custom_call.1} parent=87 // pred_check_branch
          %683 = sbr.rel (%p681) target = $region112
        $region111: #{tpu_custom_call.1} parent=87 // pred_region
          %684 = dma.done [#allocation16], 32
        $region112: #{tpu_custom_call.1} parent=87 // pred_fallthru
          _
        // Predicated region
        $region113: #{tpu_custom_call.1} parent=87 // pred_check
          %p685 = pneg %p352
        $region114: #{tpu_custom_call.1} parent=87 // pred_check_branch
          %687 = sbr.rel (%p685) target = $region116
        $region115: #{tpu_custom_call.1} parent=87 // pred_region
          %688 = dma.done [#allocation16], 32
        $region116: #{tpu_custom_call.1} parent=87 // pred_fallthru
          _
        // Predicated region
        $region117: #{tpu_custom_call.1} parent=87 // pred_check
          %p689 = pneg %p415
        $region118: #{tpu_custom_call.1} parent=87 // pred_check_branch
          %691 = sbr.rel (%p689) target = $region120
        $region119: #{tpu_custom_call.1} parent=87 // pred_region
          %692 = dma.done [#allocation19], 256
        $region120: #{tpu_custom_call.1} parent=87 // pred_fallthru
          _
        %p693 = scmp.lt.s32.totalorder %s44, 1
        %s694 = scalar_select %p693, %s44, 1
        %p695 = scmp.lt.s32.totalorder %s45, 1
        %s696 = scalar_select %p695, %s45, 1
        %s697 = smul.addr %s694, 2
        %s698 = sadd.s32 %s696, %s697
        %s699 = smul.addr %s698, 8
        %s700 = scalar_lea.vmem %s0, %s699
        %p701 = pneg %p75
        %p702 = pneg %p72
        %s703 = sand.u32 %s88, 1
        %s704 = scalar_lea.sflag [#allocation7], %s703
        %s705 = sand.u32 %s88, 1
        %s706 = smul.addr %s705, 4
        %s707 = scalar_lea.vmem [#allocation6], %s706
        %p708 = pneg %p101
        %p709 = pneg %p98
        %s710 = sand.u32 %s40, 1
        %s711 = scalar_lea.sflag [#allocation10], %s710
        %s712 = sand.u32 %s114, 1
        %s713 = smul.addr %s712, 4
        %s714 = scalar_lea.vmem [#allocation9], %s713
        %p715 = pneg %p127
        %p716 = pneg %p124
        %p717 = scmp.lt.s32.totalorder %s45, 1
        %s718 = scalar_select %p717, %s45, 1
        %s719 = smul.addr %s718, 4
        %s720 = smul.addr %s719, 4
        %s721 = scalar_lea.vmem %s3, %s720
        %p722 = pneg %p153
        %p723 = pneg %p150
        %s724 = sand.u32 %s40, 1
        %s725 = scalar_lea.sflag [#allocation10], %s724
        %s726 = sand.u32 %s166, 1
        %s727 = smul.addr %s726, 16
        %s728 = scalar_lea.vmem [#allocation11], %s727
        %p729 = pneg %p179
        %p730 = pneg %p176
        %p731 = scmp.lt.s32.totalorder %s44, 1
        %s732 = scalar_select %p731, %s44, 1
        %s733 = smul.addr %s732, 8
        %s734 = scalar_lea.vmem %s5, %s733
        %p735 = pneg %p205
        %p736 = pneg %p202
        %p737 = pneg %p226
        %p738 = pneg %p223
        %p739 = pneg %p247
        %p740 = pneg %p244
        %p741 = pneg %p268
        %p742 = pneg %p265
        %p743 = pneg %p289
        %p744 = pneg %p286
        %p745 = pneg %p310
        %p746 = pneg %p307
        %p747 = pneg %p331
        %p748 = pneg %p328
        %p749 = pneg %p352
        %p750 = pneg %p349
        %p751 = pneg %p373
        %p752 = pneg %p370
        %p753 = pneg %p394
        %p754 = pneg %p391
        %p755 = pneg %p415
        %p756 = pneg %p412
        %p757 = pneg %p436
        %p758 = pneg %p433
        %p759 = pneg %p462
        %p760 = pneg %p459
        %s761 = sand.u32 %s449, 1
        %s762 = scalar_lea.sflag [#allocation8], %s761
        %s763 = sand.u32 %s449, 1
        %s764 = smul.addr %s763, 8
        %s765 = scalar_lea.vmem [#allocation20], %s764
        %p766 = scmp.lt.s32.totalorder %s44, 1
        %s767 = scalar_select %p766, %s44, 1
        %p768 = scmp.lt.s32.totalorder %s45, 1
        %s769 = scalar_select %p768, %s45, 1
        %s770 = smul.addr %s767, 2
        %s771 = sadd.s32 %s769, %s770
        %s772 = smul.addr %s771, 8
        %s773 = scalar_lea.vmem %s0, %s772
        %p774 = scmp.lt.s32.totalorder %s45, 1
        %s775 = scalar_select %p774, %s45, 1
        %s776 = smul.addr %s775, 4
        %s777 = smul.addr %s776, 4
        %s778 = scalar_lea.vmem %s3, %s777
        %p779 = scmp.lt.s32.totalorder %s44, 1
        %s780 = scalar_select %p779, %s44, 1
        %s781 = smul.addr %s780, 8
        %s782 = scalar_lea.vmem %s5, %s781
        %p784 = scmp.eq.s32.totalorder %s45, 0
        // Predicated region
        $region121: #{tpu_custom_call.1} parent=87 // pred_check
          %p785 = pneg %p784
        $region122: #{tpu_custom_call.1} parent=87 // pred_check_branch
          %787 = sbr.rel (%p785) target = $region124
        $region123: #{tpu_custom_call.1} parent=87 // pred_region
          %v788 = vld [vmem:[%s782] sm:$0xff]
          %v789 = vpack.c.bf16 %v788, %v788
          %v790 = vld [vmem:[%s6] sm:$0xf]
          %v791 = vld [vmem:[%s6 + $0x4] sm:$0xf]
          %v792 = vld [vmem:[%s6 + $0x8] sm:$0xf]
          %v793 = vld [vmem:[%s6 + $0xc] sm:$0xf]
          %v794 = vld [vmem:[%s6 + $0x10] sm:$0xf]
          %v795 = vld [vmem:[%s6 + $0x14] sm:$0xf]
          %v796 = vld [vmem:[%s6 + $0x18] sm:$0xf]
          %v797 = vld [vmem:[%s6 + $0x1c] sm:$0xf]
          %v798 = vld [vmem:[%s6 + $0x20] sm:$0xf]
          %v799 = vld [vmem:[%s6 + $0x24] sm:$0xf]
          %v800 = vld [vmem:[%s6 + $0x28] sm:$0xf]
          %v801 = vld [vmem:[%s6 + $0x2c] sm:$0xf]
          %v802 = vld [vmem:[%s6 + $0x30] sm:$0xf]
          %v803 = vld [vmem:[%s6 + $0x34] sm:$0xf]
          %v804 = vld [vmem:[%s6 + $0x38] sm:$0xf]
          %v805 = vld [vmem:[%s6 + $0x3c] sm:$0xf]
          %v806 = vld [vmem:[#allocation12] sm:$0x1]
          %v808 = vlaneseq
          %v809 = vshrl.u32 %v808, 7
          %v810 = vsub.s32 0, %v809
          %v811 = vrot.slane %v806, %v810
          %v829 = vunpack.c.l.b16 %v790
          %v830 = vunpack.c.l.b16 %v791
          %v831 = vunpack.c.l.b16 %v792
          %v832 = vunpack.c.l.b16 %v793
          %v833 = vunpack.c.l.b16 %v794
          %v834 = vunpack.c.l.b16 %v795
          %v835 = vunpack.c.l.b16 %v796
          %v836 = vunpack.c.l.b16 %v797
          %v837 = vunpack.c.l.b16 %v798
          %v838 = vunpack.c.l.b16 %v799
          %v839 = vunpack.c.l.b16 %v800
          %v840 = vunpack.c.l.b16 %v801
          %v841 = vunpack.c.l.b16 %v802
          %v842 = vunpack.c.l.b16 %v803
          %v843 = vunpack.c.l.b16 %v804
          %v844 = vunpack.c.l.b16 %v805
          %v845 = vpack.c.b16 %v830, %v829
          %v846 = vpack.c.b16 %v832, %v831
          %v847 = vpack.c.b16 %v834, %v833
          %v848 = vpack.c.b16 %v836, %v835
          %v849 = vpack.c.b16 %v838, %v837
          %v850 = vpack.c.b16 %v840, %v839
          %v851 = vpack.c.b16 %v842, %v841
          %v852 = vpack.c.b16 %v844, %v843
          %861 = vmatprep.subr.bf16.mxu0 0
          %862 = vmatpush1.bf16.msra.mxu0 %v852
          %863 = vmatprep.subr.bf16.mxu0 0
          %864 = vmatpush1.bf16.msra.mxu0 %v851
          %865 = vmatprep.subr.bf16.mxu0 0
          %866 = vmatpush1.bf16.msra.mxu0 %v850
          %867 = vmatprep.subr.bf16.mxu0 0
          %868 = vmatpush1.bf16.msra.mxu0 %v849
          %869 = vmatprep.subr.bf16.mxu0 0
          %870 = vmatpush1.bf16.msra.mxu0 %v848
          %871 = vmatprep.subr.bf16.mxu0 0
          %872 = vmatpush1.bf16.msra.mxu0 %v847
          %873 = vmatprep.subr.bf16.mxu0 0
          %874 = vmatpush1.bf16.msra.mxu0 %v846
          %875 = vmatprep.subr.bf16.mxu0 0
          %876 = vmatpush1.bf16.msra.mxu0 %v845
          %877 = vmatprep.subr.bf16.mxu0 0
          %878 = vmatpush2.bf16.msra.mxu0 0
          %879 = vmatprep.subr.bf16.mxu0 0
          %880 = vmatpush2.bf16.msra.mxu0 0
          %881 = vmatprep.subr.bf16.mxu0 0
          %882 = vmatpush2.bf16.msra.mxu0 0
          %883 = vmatprep.subr.bf16.mxu0 0
          %884 = vmatpush2.bf16.msra.mxu0 0
          %885 = vmatprep.subr.bf16.mxu0 0
          %886 = vmatpush2.bf16.msra.mxu0 0
          %887 = vmatprep.subr.bf16.mxu0 0
          %888 = vmatpush2.bf16.msra.mxu0 0
          %889 = vmatprep.subr.bf16.mxu0 0
          %890 = vmatpush2.bf16.msra.mxu0 0
          %891 = vmatprep.subr.bf16.mxu0 0
          %892 = vmatpush2.bf16.msra.mxu0 0
          %893 = vmatprep.mubr.bf16.mxu0 0
          %894 = vmatmul.mubr.bf16.gmra.mxu0 %v789
          %v895 = vpop.f32.mrf.mxu0
          %v896 = vadd.f32 %v811, %v895
          %v897 = vpop.f32.mrf.mxu0
          %v898 = vpop.f32.mrf.mxu0
          %v899 = vpop.f32.mrf.mxu0
          %900 = vdwg.mxu0
          %v901 = vmax.f32 %v896, 0.0
          %vm902 = vcmask 261120
          %903 = vst.msk [vmem:[#allocation2] sm:$0xff] %vm902, %v901
          %904 = vst.msk [vmem:[#allocation3] sm:$0xff] %vm902, 0.0
        $region124: #{tpu_custom_call.1} parent=87 // pred_fallthru
          _
        %v905 = vld [vmem:[#allocation2] sm:$0xff]
        %vm906 = vcmask 261120
        %v907 = vsel %vm906, %v905, 0.0
        %908 = vadd.xlane.f32.xlu0 %v907
        %v909 = vpop.xlane.xlu0 %908
        %v910 = vrcp.pop 32.0
        %v911 = vmul.f32 %v909, %v910
        %v912 = vsub.f32 %v905, %v911
        %v913 = vmul.f32 %v912, %v912
        %v914 = vsel %vm906, %v913, 0.0
        %915 = vadd.xlane.f32.xlu0 %v914
        %v916 = vpop.xlane.xlu0 %915
        %v917 = vmul.f32 %v916, %v910
        %v918 = vadd.f32 %v917, 1e-05
        %v919 = vrsqrt.pop %v918
        %v920 = vmul.f32 %v912, %v919
        %s921 = scalar_lea.vmem [#allocation14], %s45
        %v922 = vld [vmem:[%s921] sm:$0x1]
        %v923 = vlaneseq
        %v924 = vshrl.u32 %v923, 7
        %v925 = vsub.s32 0, %v924
        %v926 = vrot.slane %v922, %v925
        %v927 = vmul.f32 %v920, %v926
        %s928 = scalar_lea.vmem [#allocation15], %s45
        %v929 = vld [vmem:[%s928] sm:$0x1]
        %v930 = vlaneseq
        %v931 = vshrl.u32 %v930, 7
        %v932 = vsub.s32 0, %v931
        %v933 = vrot.slane %v929, %v932
        %v934 = vadd.f32 %v927, %v933
        %v935 = vld [vmem:[%s650] sm:$0xf]
        %v936 = vunpack.c.l.bf16 %v935
        %937 = vst.msk [vmem:[#allocation4] sm:$0xff] %vm906, %v936
        %v938 = vld [vmem:[%s659] sm:$0xf]
        %v939 = vunpack.c.l.bf16 %v938
        %940 = vst.msk [vmem:[#allocation5] sm:$0xff] %vm906, %v939
        %v941 = vlaneseq
        %v942 = vshrl.u32 %v941, 7
        %s943 = scalar_lea.vmem %s10, %s45
        %v944 = vld [vmem:[%s943] sm:$0x1]
        %v945 = vld [vmem:[#allocation4] sm:$0x1]
        %v946 = vadd.f32 %v944, %v945
        %v947 = vlaneseq
        %v948 = vshrl.u32 %v947, 7
        %v949 = vsub.s32 0, %v948
        %v950 = vrot.slane %v946, %v949
        %v951 = vmul.f32 %v934, %v950
        loop: start=1, step=1, limit=8
        $region125: #{tpu_custom_call.1} parent=87 // loop_pre_header
          _
        $region126: #{tpu_custom_call.1} parent=87 // loop_header
          %s953 = sphi 1, %s957
          %p954 = scmp.ge.s32.totalorder %s953, 8
          %v958 = vphi %v951, %v977
          %v959 = vphi %v934, %v960
        $region127: #{tpu_custom_call.1} parent=87 // loop_header_branch
          %956 = sbr.rel (%p954) target = $region131
        $region128: #{tpu_custom_call.1} parent=87 // loop_body
          %v960 = vrot.slane %v959, 7
          %v961 = vstv %s953
          %vm962 = vcmp.ge.s32.totalorder %v942, %v961
          %s963 = scalar_lea.vmem [#allocation4], %s953
          %v964 = vld [vmem:[%s963] sm:$0x1]
          %s965 = scalar_lea.vmem [#allocation5], %s953
          %v966 = vld [vmem:[%s965] sm:$0x1]
          %v967 = vlaneseq
          %v968 = vshrl.u32 %v967, 7
          %v969 = vsub.s32 0, %v968
          %v970 = vrot.slane %v964, %v969
          %v971 = vlaneseq
          %v972 = vshrl.u32 %v971, 7
          %v973 = vsub.s32 0, %v972
          %v974 = vrot.slane %v966, %v973
          %v975 = vsel %vm962, %v970, %v974
          %v976 = vmul.f32 %v975, %v960
          %v977 = vadd.f32 %v958, %v976
        $region129: #{tpu_custom_call.1} parent=87 // loop_footer
          %s957 = sadd.s32 1, %s953
        $region130: #{tpu_custom_call.1} parent=87 // loop_footer_branch
          %952 = sbr.rel target = $region126
        $region131: #{tpu_custom_call.1} parent=87 // loop_exit
          _
        %v978 = vmul.f32 %v958, %v958
        %v979 = vmul.f32 %v958, %v978
        %v980 = vmul.f32 %v979, 0.044715
        %v981 = vadd.f32 %v958, %v980
        %v982 = vmul.f32 %v981, 0.7978846
        %v983 = vtanh.pop %v982
        %v984 = vadd.f32 %v983, 1.0
        %v985 = vmul.f32 %v984, 0.5
        %v986 = vmul.f32 %v958, %v985
        %v987 = vpack.c.bf16 %v986, %v986
        %v988 = vld [vmem:[%s778] sm:$0xf]
        %v989 = vld [vmem:[%s778 + $0x4] sm:$0xf]
        %v990 = vld [vmem:[%s778 + $0x8] sm:$0xf]
        %v991 = vld [vmem:[%s778 + $0xc] sm:$0xf]
        %s992 = scalar_lea.vmem %s11, %s45
        %v993 = vld [vmem:[%s992] sm:$0x1]
        %v994 = vlaneseq
        %v995 = vshrl.u32 %v994, 7
        %v996 = vsub.s32 0, %v995
        %v997 = vrot.slane %v993, %v996
        %v1002 = vunpack.c.l.b16 %v988
        %v1003 = vunpack.c.l.b16 %v989
        %v1004 = vunpack.c.l.b16 %v990
        %v1005 = vunpack.c.l.b16 %v991
        %v1006 = vpack.c.b16 %v1003, %v1002
        %v1007 = vpack.c.b16 %v1005, %v1004
        %v1011 = vsel %vm906, %v987, 0
        %1013 = vmatprep.subr.bf16.mxu0 0
        %1014 = vmatpush1.bf16.msra.mxu0 0
        %1015 = vmatprep.subr.bf16.mxu0 0
        %1016 = vmatpush1.bf16.msra.mxu0 0
        %1017 = vmatprep.subr.bf16.mxu0 0
        %1018 = vmatpush1.bf16.msra.mxu0 0
        %1019 = vmatprep.subr.bf16.mxu0 0
        %1020 = vmatpush1.bf16.msra.mxu0 0
        %1021 = vmatprep.subr.bf16.mxu0 0
        %1022 = vmatpush1.bf16.msra.mxu0 0
        %1023 = vmatprep.subr.bf16.mxu0 0
        %1024 = vmatpush1.bf16.msra.mxu0 0
        %1025 = vmatprep.subr.bf16.mxu0 0
        %1026 = vmatpush1.bf16.msra.mxu0 %v1007
        %1027 = vmatprep.subr.bf16.mxu0 0
        %1028 = vmatpush1.bf16.msra.mxu0 %v1006
        %1029 = vmatprep.subr.bf16.mxu0 0
        %1030 = vmatpush2.bf16.msra.mxu0 0
        %1031 = vmatprep.subr.bf16.mxu0 0
        %1032 = vmatpush2.bf16.msra.mxu0 0
        %1033 = vmatprep.subr.bf16.mxu0 0
        %1034 = vmatpush2.bf16.msra.mxu0 0
        %1035 = vmatprep.subr.bf16.mxu0 0
        %1036 = vmatpush2.bf16.msra.mxu0 0
        %1037 = vmatprep.subr.bf16.mxu0 0
        %1038 = vmatpush2.bf16.msra.mxu0 0
        %1039 = vmatprep.subr.bf16.mxu0 0
        %1040 = vmatpush2.bf16.msra.mxu0 0
        %1041 = vmatprep.subr.bf16.mxu0 0
        %1042 = vmatpush2.bf16.msra.mxu0 0
        %1043 = vmatprep.subr.bf16.mxu0 0
        %1044 = vmatpush2.bf16.msra.mxu0 0
        %1045 = vmatprep.mubr.bf16.mxu0 0
        %1046 = vmatmul.mubr.bf16.gmra.mxu0 %v1011
        %v1047 = vpop.f32.mrf.mxu0
        %v1048 = vadd.f32 %v997, %v1047
        %v1049 = vpop.f32.mrf.mxu0
        %v1050 = vpop.f32.mrf.mxu0
        %v1051 = vpop.f32.mrf.mxu0
        %1052 = vdwg.mxu0
        %v1053 = vadd.f32 %v1048, %v905
        %v1054 = vld [vmem:[%s773] sm:$0xff]
        %v1055 = vadd.f32 %v1053, %v1054
        %v1056 = vtanh.pop %v1055
        %v1057 = vxor.u32 %v1055, 2147483648
        %v1058 = vmul.f32 %v1057, 1.442695
        %v1059 = vpow.pop %v1058
        %v1060 = vadd.f32 %v1059, 1.0
        %v1061 = vrcp.pop %v1060
        %v1062 = vmul.f32 1.0, %v1061
        %v1063 = vmul.f32 %v1056, %v1062
        %v1064 = vpack.c.bf16 %v1063, %v1063
        %v1065 = vld [vmem:[%s668] sm:$0xf]
        %v1066 = vld [vmem:[%s668 + $0x4] sm:$0xf]
        %v1067 = vld [vmem:[%s668 + $0x8] sm:$0xf]
        %v1068 = vld [vmem:[%s668 + $0xc] sm:$0xf]
        %s1069 = scalar_lea.vmem [#allocation17], %s45
        %v1070 = vld [vmem:[%s1069] sm:$0x1]
        %v1071 = vlaneseq
        %v1072 = vshrl.u32 %v1071, 7
        %v1073 = vsub.s32 0, %v1072
        %v1074 = vrot.slane %v1070, %v1073
        %v1079 = vunpack.c.l.b16 %v1065
        %v1080 = vunpack.c.l.b16 %v1066
        %v1081 = vunpack.c.l.b16 %v1067
        %v1082 = vunpack.c.l.b16 %v1068
        %v1083 = vpack.c.b16 %v1080, %v1079
        %v1084 = vpack.c.b16 %v1082, %v1081
        %v1088 = vsel %vm906, %v1064, 0
        %1090 = vmatprep.subr.bf16.mxu0 0
        %1091 = vmatpush1.bf16.msra.mxu0 0
        %1092 = vmatprep.subr.bf16.mxu0 0
        %1093 = vmatpush1.bf16.msra.mxu0 0
        %1094 = vmatprep.subr.bf16.mxu0 0
        %1095 = vmatpush1.bf16.msra.mxu0 0
        %1096 = vmatprep.subr.bf16.mxu0 0
        %1097 = vmatpush1.bf16.msra.mxu0 0
        %1098 = vmatprep.subr.bf16.mxu0 0
        %1099 = vmatpush1.bf16.msra.mxu0 0
        %1100 = vmatprep.subr.bf16.mxu0 0
        %1101 = vmatpush1.bf16.msra.mxu0 0
        %1102 = vmatprep.subr.bf16.mxu0 0
        %1103 = vmatpush1.bf16.msra.mxu0 %v1084
        %1104 = vmatprep.subr.bf16.mxu0 0
        %1105 = vmatpush1.bf16.msra.mxu0 %v1083
        %1106 = vmatprep.subr.bf16.mxu0 0
        %1107 = vmatpush2.bf16.msra.mxu0 0
        %1108 = vmatprep.subr.bf16.mxu0 0
        %1109 = vmatpush2.bf16.msra.mxu0 0
        %1110 = vmatprep.subr.bf16.mxu0 0
        %1111 = vmatpush2.bf16.msra.mxu0 0
        %1112 = vmatprep.subr.bf16.mxu0 0
        %1113 = vmatpush2.bf16.msra.mxu0 0
        %1114 = vmatprep.subr.bf16.mxu0 0
        %1115 = vmatpush2.bf16.msra.mxu0 0
        %1116 = vmatprep.subr.bf16.mxu0 0
        %1117 = vmatpush2.bf16.msra.mxu0 0
        %1118 = vmatprep.subr.bf16.mxu0 0
        %1119 = vmatpush2.bf16.msra.mxu0 0
        %1120 = vmatprep.subr.bf16.mxu0 0
        %1121 = vmatpush2.bf16.msra.mxu0 0
        %1122 = vmatprep.mubr.bf16.mxu0 0
        %1123 = vmatmul.mubr.bf16.gmra.mxu0 %v1088
        %v1124 = vpop.f32.mrf.mxu0
        %v1125 = vadd.f32 %v1074, %v1124
        %v1126 = vpop.f32.mrf.mxu0
        %v1127 = vpop.f32.mrf.mxu0
        %v1128 = vpop.f32.mrf.mxu0
        %1129 = vdwg.mxu0
        %v1130 = vadd.f32 %v1125, %v1053
        %v1131 = vld [vmem:[#allocation3] sm:$0xff]
        %1133 = vrot.lane.b32.xlu0 %v1125, 96
        %v1134 = vpop.permute.xlu0 %1133
        %v1136 = vadd.f32 %v1131, %v1134
        %1137 = vst.msk [vmem:[#allocation2] sm:$0xff] %vm906, %v1130
        %1138 = vst.msk [vmem:[#allocation3] sm:$0xff] %vm906, %v1136
        %p1139 = scmp.eq.s32.totalorder %s45, 1
        // Predicated region
        $region132: #{tpu_custom_call.1} parent=87 // pred_check
          %p1140 = pneg %p1139
        $region133: #{tpu_custom_call.1} parent=87 // pred_check_branch
          %1142 = sbr.rel (%p1140) target = $region135
        $region134: #{tpu_custom_call.1} parent=87 // pred_region
          %v1143 = vpack.c.bf16 %v1136, %v1136
          %v1144 = vld [vmem:[%s13] sm:$0xf]
          %v1145 = vld [vmem:[%s13 + $0x4] sm:$0xf]
          %v1146 = vld [vmem:[%s13 + $0x8] sm:$0xf]
          %v1147 = vld [vmem:[%s13 + $0xc] sm:$0xf]
          %v1148 = vld [vmem:[%s14] sm:$0x1]
          %v1150 = vlaneseq
          %v1151 = vshrl.u32 %v1150, 7
          %v1152 = vsub.s32 0, %v1151
          %v1153 = vrot.slane %v1148, %v1152
          %v1159 = vunpack.c.l.b16 %v1144
          %v1160 = vunpack.c.l.b16 %v1145
          %v1161 = vunpack.c.l.b16 %v1146
          %v1162 = vunpack.c.l.b16 %v1147
          %v1163 = vpack.c.b16 %v1160, %v1159
          %v1164 = vpack.c.b16 %v1162, %v1161
          %v1168 = vsel %vm906, %v1143, 0
          %1170 = vmatprep.subr.bf16.mxu0 0
          %1171 = vmatpush1.bf16.msra.mxu0 0
          %1172 = vmatprep.subr.bf16.mxu0 0
          %1173 = vmatpush1.bf16.msra.mxu0 0
          %1174 = vmatprep.subr.bf16.mxu0 0
          %1175 = vmatpush1.bf16.msra.mxu0 0
          %1176 = vmatprep.subr.bf16.mxu0 0
          %1177 = vmatpush1.bf16.msra.mxu0 0
          %1178 = vmatprep.subr.bf16.mxu0 0
          %1179 = vmatpush1.bf16.msra.mxu0 0
          %1180 = vmatprep.subr.bf16.mxu0 0
          %1181 = vmatpush1.bf16.msra.mxu0 0
          %1182 = vmatprep.subr.bf16.mxu0 0
          %1183 = vmatpush1.bf16.msra.mxu0 %v1164
          %1184 = vmatprep.subr.bf16.mxu0 0
          %1185 = vmatpush1.bf16.msra.mxu0 %v1163
          %1186 = vmatprep.subr.bf16.mxu0 0
          %1187 = vmatpush2.bf16.msra.mxu0 0
          %1188 = vmatprep.subr.bf16.mxu0 0
          %1189 = vmatpush2.bf16.msra.mxu0 0
          %1190 = vmatprep.subr.bf16.mxu0 0
          %1191 = vmatpush2.bf16.msra.mxu0 0
          %1192 = vmatprep.subr.bf16.mxu0 0
          %1193 = vmatpush2.bf16.msra.mxu0 0
          %1194 = vmatprep.subr.bf16.mxu0 0
          %1195 = vmatpush2.bf16.msra.mxu0 0
          %1196 = vmatprep.subr.bf16.mxu0 0
          %1197 = vmatpush2.bf16.msra.mxu0 0
          %1198 = vmatprep.subr.bf16.mxu0 0
          %1199 = vmatpush2.bf16.msra.mxu0 0
          %1200 = vmatprep.subr.bf16.mxu0 0
          %1201 = vmatpush2.bf16.msra.mxu0 0
          %1202 = vmatprep.mubr.bf16.mxu0 0
          %1203 = vmatmul.mubr.bf16.gmra.mxu0 %v1168
          %v1204 = vpop.f32.mrf.mxu0
          %v1205 = vadd.f32 %v1153, %v1204
          %v1206 = vpop.f32.mrf.mxu0
          %v1207 = vpop.f32.mrf.mxu0
          %v1208 = vpop.f32.mrf.mxu0
          %1209 = vdwg.mxu0
          %v1210 = vmax.f32 %v1205, 0.0
          %v1211 = vpack.c.bf16 %v1210, %v1210
          %v1212 = vld [vmem:[#allocation18] sm:$0xf]
          %v1213 = vld [vmem:[#allocation18 + $0x4] sm:$0xf]
          %v1214 = vld [vmem:[#allocation18 + $0x8] sm:$0xf]
          %v1215 = vld [vmem:[#allocation18 + $0xc] sm:$0xf]
          %v1216 = vld [vmem:[%s16] sm:$0x1]
          %v1218 = vlaneseq
          %v1219 = vshrl.u32 %v1218, 7
          %v1220 = vsub.s32 0, %v1219
          %v1221 = vrot.slane %v1216, %v1220
          %v1227 = vunpack.c.l.b16 %v1212
          %v1228 = vunpack.c.l.b16 %v1213
          %v1229 = vunpack.c.l.b16 %v1214
          %v1230 = vunpack.c.l.b16 %v1215
          %v1231 = vpack.c.b16 %v1228, %v1227
          %v1232 = vpack.c.b16 %v1230, %v1229
          %v1236 = vsel %vm906, %v1211, 0
          %1238 = vmatprep.subr.bf16.mxu0 0
          %1239 = vmatpush1.bf16.msra.mxu0 0
          %1240 = vmatprep.subr.bf16.mxu0 0
          %1241 = vmatpush1.bf16.msra.mxu0 0
          %1242 = vmatprep.subr.bf16.mxu0 0
          %1243 = vmatpush1.bf16.msra.mxu0 0
          %1244 = vmatprep.subr.bf16.mxu0 0
          %1245 = vmatpush1.bf16.msra.mxu0 0
          %1246 = vmatprep.subr.bf16.mxu0 0
          %1247 = vmatpush1.bf16.msra.mxu0 0
          %1248 = vmatprep.subr.bf16.mxu0 0
          %1249 = vmatpush1.bf16.msra.mxu0 0
          %1250 = vmatprep.subr.bf16.mxu0 0
          %1251 = vmatpush1.bf16.msra.mxu0 %v1232
          %1252 = vmatprep.subr.bf16.mxu0 0
          %1253 = vmatpush1.bf16.msra.mxu0 %v1231
          %1254 = vmatprep.subr.bf16.mxu0 0
          %1255 = vmatpush2.bf16.msra.mxu0 0
          %1256 = vmatprep.subr.bf16.mxu0 0
          %1257 = vmatpush2.bf16.msra.mxu0 0
          %1258 = vmatprep.subr.bf16.mxu0 0
          %1259 = vmatpush2.bf16.msra.mxu0 0
          %1260 = vmatprep.subr.bf16.mxu0 0
          %1261 = vmatpush2.bf16.msra.mxu0 0
          %1262 = vmatprep.subr.bf16.mxu0 0
          %1263 = vmatpush2.bf16.msra.mxu0 0
          %1264 = vmatprep.subr.bf16.mxu0 0
          %1265 = vmatpush2.bf16.msra.mxu0 0
          %1266 = vmatprep.subr.bf16.mxu0 0
          %1267 = vmatpush2.bf16.msra.mxu0 0
          %1268 = vmatprep.subr.bf16.mxu0 0
          %1269 = vmatpush2.bf16.msra.mxu0 0
          %1270 = vmatprep.mubr.bf16.mxu0 0
          %1271 = vmatmul.mubr.bf16.gmra.mxu0 %v1236
          %v1272 = vpop.f32.mrf.mxu0
          %v1273 = vadd.f32 %v1221, %v1272
          %v1274 = vpop.f32.mrf.mxu0
          %v1275 = vpop.f32.mrf.mxu0
          %v1276 = vpop.f32.mrf.mxu0
          %1277 = vdwg.mxu0
          %v1278 = vld [vmem:[%s782] sm:$0xff]
          %v1279 = vadd.f32 %v1273, %v1278
          %1280 = vst [vmem:[%s765] sm:$0xff] %v1279
        $region135: #{tpu_custom_call.1} parent=87 // pred_fallthru
          _
        %s1281 = sand.u32 %s449, 1
        %s1282 = scalar_lea.sflag [#allocation8], %s1281
        %s1283 = sand.u32 %s449, 1
        %s1284 = smul.addr %s1283, 8
        %s1285 = scalar_lea.vmem [#allocation20], %s1284
        // Predicated region
        $region136: #{tpu_custom_call.1} parent=87 // pred_check
          %p1286 = pneg %p459
        $region137: #{tpu_custom_call.1} parent=87 // pred_check_branch
          %1288 = sbr.rel (%p1286) target = $region139
        $region138: #{tpu_custom_call.1} parent=87 // pred_region
          %s1290 = ssub.s32 128, 128
          %1291 = vsyncadd %s1282, %s1290
          %s1292 = smul.addr %s44, 128
          %s1293 = scalar_lea.hbm %s17, %s1292
          %s1295 = sshll.u32 %s1285, 4
          %s1296 = int_to_ptr.vmem [resolvable:$true] %s1295
          %1298 = dma.vmem_to_hbm [thread:$0]  %s1296, 128, %s1293, %s1282
        $region139: #{tpu_custom_call.1} parent=87 // pred_fallthru
          _
      $region88: #{tpu_custom_call.1} parent=5 // pred_fallthru
        _
      %p1299 = scmp.le.s32.totalorder 2, %s35
      // Predicated region
      $region140: #{tpu_custom_call.1} parent=5 // pred_check
        %p1300 = pneg %p1299
      $region141: #{tpu_custom_call.1} parent=5 // pred_check_branch
        %1302 = sbr.rel (%p1300) target = $region143
      $region142: #{tpu_custom_call.1} parent=5 // pred_region
        %s1303 = ssub.s32 %s35, 2
        // Predicated region
        $region144: #{tpu_custom_call.1} parent=142 // pred_check
          %p1304 = pneg %p465
        $region145: #{tpu_custom_call.1} parent=142 // pred_check_branch
          %1306 = sbr.rel (%p1304) target = $region147
        $region146: #{tpu_custom_call.1} parent=142 // pred_region
          %s1307 = sand.u32 %s450, 1
          %s1308 = scalar_lea.sflag [#allocation8], %s1307
          %s1309 = sand.u32 %s450, 1
          %s1310 = smul.addr %s1309, 8
          %s1311 = scalar_lea.vmem [#allocation20], %s1310
          %1312 = dma.done %s1308, 128
        $region147: #{tpu_custom_call.1} parent=142 // pred_fallthru
          _
      $region143: #{tpu_custom_call.1} parent=5 // pred_fallthru
        _
    $region6: #{tpu_custom_call.1} parent=1 // loop_footer
      %s39 = sadd.s32 1, %s35
    $region7: #{tpu_custom_call.1} parent=1 // loop_footer_branch
      %34 = sbr.rel target = $region3
    $region8: #{tpu_custom_call.1} parent=1 // loop_exit
      _
    %1313 = vsyncpa [#allocation7], 1
    %s1314 = scalar_lea.sflag [#allocation7], 1
    %1315 = vsyncpa %s1314, 1
    %1316 = vsyncpa [#allocation10], 1
    %s1317 = scalar_lea.sflag [#allocation10], 1
    %1318 = vsyncpa %s1317, 1
    %1319 = vsyncpa [#allocation13], 1
    %1320 = vsyncpa [#allocation16], 1
    %1321 = vsyncpa [#allocation19], 1
    %1322 = vsyncpa [#allocation8], 1
    %s1323 = scalar_lea.sflag [#allocation8], 1
    %1324 = vsyncpa %s1323, 1

</llo_original>
